<compile_context>
chip_gen: v5e
topology: v5e:2x2
jax: 0.10.0
libtpu: 0.0.40
codegen_flags: <defaults>
</compile_context>

<pallas_src>
import functools

import jax
import jax.numpy as jnp
import numpy as np
from jax import lax
from jax.experimental import pallas as pl
from jax.experimental.pallas import tpu as pltpu

EPS = 1e-5
_LANE = 128


# --------------------------------------------------------------------------------------
# helpers
# --------------------------------------------------------------------------------------
def _round_up(x, m):
    return (x + m - 1) // m * m


def _largest_divisor(n, cap):
    t = max(1, min(int(cap), n))
    while n % t:
        t -= 1
    return t


def _vmem_cap():
    """Per-core VMEM budget: physical capacity minus headroom for Mosaic internal scratch."""
    cap = 128 * 1024 * 1024
    try:
        cap = int(pltpu.get_tpu_info().vmem_capacity_bytes)
    except Exception:
        pass
    # v7x 64 MiB -> ~56 MiB usable, v5e/v6e 128 MiB -> ~112 MiB usable
    return cap - max(8 * 1024 * 1024, cap // 8)


def _conv_footprint(tn, L, Cp, cd_bytes):
    """Explicit VMEM footprint of one conv-pass grid step (double-buffered blocks + temps)."""
    blk = tn * L * Cp
    act_io = 4 * blk * cd_bytes            # 2x input block + 2x output block
    w = 2 * 3 * Cp * Cp * cd_bytes         # (3, Cp, Cp) weight (double-buffered)
    stats = 2 * 8 * Cp * 4                 # (1, 8, Cp) f32 stats block
    vecs = 4 * 2 * Cp * 4                  # BN scale/shift vectors (pass 2)
    temps = blk * (2 * cd_bytes + 4 * 4)   # +/-1 shifted views (cd) + f32 h/acc/diff temps
    return act_io + w + stats + vecs + temps


def _pw_footprint(tn, tl, Cp, cd_bytes):
    blk = tn * tl * Cp
    return blk * (6 * cd_bytes + 2 * 4) + 4 * 2 * Cp * 4


def _choose_tn(N, L, Cp, cd_bytes, budget, requested=None):
    if requested is not None:
        return _largest_divisor(N, requested)
    divisors = [t for t in range(1, N + 1) if N % t == 0]
    fitting = [t for t in divisors if _conv_footprint(t, L, Cp, cd_bytes) <= budget]
    if not fitting:
        return 1
    # Smallest tile that already fills the MXU M dim (>=512 rows) keeps several grid steps
    # available for megacore sharding; otherwise take the largest tile that fits VMEM.
    filled = [t for t in fitting if t * L >= 512]
    return min(filled) if filled else max(fitting)


def _choose_tl(L, tn, Cp, cd_bytes, budget, requested=None):
    if requested is not None and L % requested == 0:
        return requested
    for t in (4096, 2048, 1024, 512, 256, 128, 64, 32, 16, 8):
        if t <= L and L % t == 0 and _pw_footprint(tn, t, Cp, cd_bytes) <= budget:
            return t
    return _largest_divisor(L, 8)


# --------------------------------------------------------------------------------------
# kernels (activations in NLC layout, channels zero-padded to a multiple of 128 lanes)
# --------------------------------------------------------------------------------------
_DN = (((2,), (0,)), ((), ()))   # contract last dim of (TN, L, C) with first dim of (C, C)


def _shift_pm1(x):
    """Return (x[l-1], x[l+1]) along the L axis with zero boundary rows."""
    TN, L, C = x.shape
    zrow = jnp.zeros((TN, 1, C), x.dtype)
    x_m1 = jnp.concatenate([zrow, x[:, :L - 1, :]], axis=1)
    x_p1 = jnp.concatenate([x[:, 1:, :], zrow], axis=1)
    return x_m1, x_p1


def _conv3_taps(x, w_ref):
    """3-tap 'same' conv as three K=C matmuls (f32 accumulation); no 3C concat operand."""
    x_m1, x_p1 = _shift_pm1(x)
    out = lax.dot_general(x_m1, w_ref[0], _DN, preferred_element_type=jnp.float32)
    out = out + lax.dot_general(x, w_ref[1], _DN, preferred_element_type=jnp.float32)
    out = out + lax.dot_general(x_p1, w_ref[2], _DN, preferred_element_type=jnp.float32)
    return out


def _centered_stats(out):
    """(1, 8, C) block: row 0 = per-tile channel sum, row 1 = centered sum-of-squares."""
    TN, L, C = out.shape
    s = jnp.sum(out, axis=(0, 1), keepdims=True)               # (1, 1, C) f32
    m = s * (1.0 / (TN * L))
    d = out - m
    css = jnp.sum(d * d, axis=(0, 1), keepdims=True)           # (1, 1, C) f32
    return jnp.concatenate([s, css, jnp.zeros((1, 6, C), jnp.float32)], axis=1)


def _conv3_bnstats_kernel(x_ref, w_ref, y_ref, stats_ref):
    """conv1 (3 per-tap matmuls) + per-channel centered BN1 statistics."""
    out = _conv3_taps(x_ref[...], w_ref)
    y_ref[...] = out.astype(y_ref.dtype)
    stats_ref[...] = _centered_stats(out)


def _bn_relu_conv3_bnstats_kernel(y1_ref, s1_ref, t1_ref, w_ref, y2_ref, stats_ref):
    """Folded BN1 (scale/shift, f32) + ReLU, then conv2 + centered BN2 statistics."""
    C = y1_ref.shape[-1]
    scale = s1_ref[...].reshape(1, 1, C)
    shift = t1_ref[...].reshape(1, 1, C)
    h = jnp.maximum(y1_ref[...].astype(jnp.float32) * scale + shift, 0.0)
    out = _conv3_taps(h.astype(w_ref.dtype), w_ref)
    y2_ref[...] = out.astype(y2_ref.dtype)
    stats_ref[...] = _centered_stats(out)


def _bn_add_relu_kernel(y2_ref, x_ref, s2_ref, t2_ref, o_ref):
    """Pointwise epilogue: folded BN2 + identity residual + ReLU."""
    C = y2_ref.shape[-1]
    scale = s2_ref[...].reshape(1, 1, C)
    shift = t2_ref[...].reshape(1, 1, C)
    h = y2_ref[...].astype(jnp.float32) * scale + shift
    o_ref[...] = jnp.maximum(h + x_ref[...].astype(jnp.float32), 0.0).astype(o_ref.dtype)


# --------------------------------------------------------------------------------------
# wrapper
# --------------------------------------------------------------------------------------
def basic_block(x_ncl, w1, g1, b1, w2, g2, b2, *,
                compute_dtype=jnp.bfloat16, block_n=None, block_l=None):
    """BasicBlock forward (stride=1, downsample=None, training-mode BatchNorm1d).

    x_ncl: (N, C, L) like PyTorch. w*: (Cout, Cin, 3) PyTorch Conv1d weights (bias=False).
    compute_dtype: bf16 (default; BN math stays f32) or f32 for exact comparison.
    """
    N, Cin, L = x_ncl.shape
    Cout = w1.shape[0]
    assert Cin == Cout and w2.shape[0] == w2.shape[1] == Cout, \
        "downsample=None requires inplanes == planes"
    assert L >= 2
    # TODO(synk): stride > 1 and a non-None downsample branch are not implemented.

    Cp = _round_up(Cout, _LANE)                    # lane-dense channel axis
    out_dtype = x_ncl.dtype
    cd_bytes = jnp.dtype(compute_dtype).itemsize
    vmem = pltpu.MemorySpace.VMEM
    budget = _vmem_cap()

    # ---- layout prep: NCL -> NLC, zero-pad channels to Cp ----
    # TODO(synk): fold transpose/pad into pass-1 / pass-3 DMA (in-kernel block transpose).
    x_nlc = jnp.transpose(x_ncl, (0, 2, 1)).astype(compute_dtype)
    if Cp != Cin:
        x_nlc = jnp.pad(x_nlc, ((0, 0), (0, 0), (0, Cp - Cin)))

    def prep_w(w):
        wk = jnp.transpose(w, (2, 1, 0)).astype(compute_dtype)          # (3, Cin, Cout)
        return jnp.pad(wk, ((0, 0), (0, Cp - Cin), (0, Cp - Cout)))     # (3, Cp, Cp)

    w1k, w2k = prep_w(w1), prep_w(w2)

    tn = _choose_tn(N, L, Cp, cd_bytes, budget, block_n)
    n_tiles = N // tn
    n_per_tile = jnp.float32(tn * L)
    cnt = jnp.float32(N * L)

    act_spec = pl.BlockSpec((tn, L, Cp), lambda i: (i, 0, 0), memory_space=vmem)
    w_spec = pl.BlockSpec((3, Cp, Cp), lambda i: (0, 0, 0), memory_space=vmem)
    stats_spec = pl.BlockSpec((1, 8, Cp), lambda i: (i, 0, 0), memory_space=vmem)
    vec_spec = pl.BlockSpec((1, Cp), lambda i: (0, 0), memory_space=vmem)

    conv_vmem = int(min(budget, max(_conv_footprint(tn, L, Cp, cd_bytes) * 5 // 4,
                                    16 * 1024 * 1024)))
    conv_params = pltpu.CompilerParams(
        dimension_semantics=("parallel",), vmem_limit_bytes=conv_vmem)

    # ---------------- pass 1: conv1 + BN1 statistics ----------------
    # TODO(synk): L-halo tiling (extra grid axis) for very long L.
    y1, stats1 = pl.pallas_call(
        _conv3_bnstats_kernel,
        grid=(n_tiles,),
        in_specs=[act_spec, w_spec],
        out_specs=(act_spec, stats_spec),
        out_shape=(jax.ShapeDtypeStruct((N, L, Cp), compute_dtype),
                   jax.ShapeDtypeStruct((n_tiles, 8, Cp), jnp.float32)),
        compiler_params=conv_params,
    )(x_nlc, w1k)

    def bn_scale_shift(stats, g, b):
        # Parallel (per-tile centered) variance combine — avoids E[x^2]-E[x]^2 cancellation.
        sums = stats[:, 0, :]                                    # (n_tiles, Cp)
        css = stats[:, 1, :]
        tile_mean = sums / n_per_tile
        mean = jnp.sum(sums, axis=0) / cnt
        var = (jnp.sum(css, axis=0)
               + n_per_tile * jnp.sum(jnp.square(tile_mean - mean[None, :]), axis=0)) / cnt
        var = jnp.maximum(var, 0.0)                              # biased variance
        gp = jnp.pad(g.astype(jnp.float32), (0, Cp - Cout), constant_values=1.0)
        bp = jnp.pad(b.astype(jnp.float32), (0, Cp - Cout))
        s = gp * lax.rsqrt(var + EPS)
        t = bp - mean * s
        return s.reshape(1, Cp), t.reshape(1, Cp)

    s1, t1 = bn_scale_shift(stats1, g1, b1)

    # -------- pass 2: BN1 + ReLU + conv2 + BN2 statistics --------
    y2, stats2 = pl.pallas_call(
        _bn_relu_conv3_bnstats_kernel,
        grid=(n_tiles,),
        in_specs=[act_spec, vec_spec, vec_spec, w_spec],
        out_specs=(act_spec, stats_spec),
        out_shape=(jax.ShapeDtypeStruct((N, L, Cp), compute_dtype),
                   jax.ShapeDtypeStruct((n_tiles, 8, Cp), jnp.float32)),
        compiler_params=conv_params,
    )(y1, s1, t1, w2k)

    s2, t2 = bn_scale_shift(stats2, g2, b2)

    # -------- pass 3: BN2 + residual + ReLU (pointwise; output aliases y2's buffer) --------
    tl = _choose_tl(L, tn, Cp, cd_bytes, budget, block_l)
    l_tiles = L // tl
    pw_spec = pl.BlockSpec((tn, tl, Cp), lambda i, j: (i, j, 0), memory_space=vmem)
    vec_spec2 = pl.BlockSpec((1, Cp), lambda i, j: (0, 0), memory_space=vmem)
    pw_vmem = int(min(budget, max(_pw_footprint(tn, tl, Cp, cd_bytes) * 5 // 4,
                                  16 * 1024 * 1024)))

    out_nlc = pl.pallas_call(
        _bn_add_relu_kernel,
        grid=(n_tiles, l_tiles),
        in_specs=[pw_spec, pw_spec, vec_spec2, vec_spec2],
        out_specs=pw_spec,
        out_shape=jax.ShapeDtypeStruct((N, L, Cp), compute_dtype),
        input_output_aliases={0: 0},       # reuse y2's HBM buffer for the output
        compiler_params=pltpu.CompilerParams(
            dimension_semantics=("parallel", "parallel"), vmem_limit_bytes=pw_vmem),
    )(y2, x_nlc, s2, t2)

    # drop channel padding, back to NCL
    return jnp.transpose(out_nlc[:, :, :Cout], (0, 2, 1)).astype(out_dtype)


# --------------------------------------------------------------------------------------
# pure-JAX reference (NCL layout) mirroring the PyTorch forward
# --------------------------------------------------------------------------------------
def ref_basic_block(x, w1, g1, b1, w2, g2, b2):
    def conv(x, w):
        return jax.lax.conv_general_dilated(
            x, w, window_strides=(1,), padding=((1, 1),),
            dimension_numbers=('NCH', 'OIH', 'NCH'))

    def bn(x, g, b):
        m = jnp.mean(x, axis=(0, 2), keepdims=True)
        v = jnp.mean((x - m) ** 2, axis=(0, 2), keepdims=True)
        return (x - m) * jax.lax.rsqrt(v + EPS) * g[None, :, None] + b[None, :, None]

    out = jax.nn.relu(bn(conv(x, w1), g1, b1))
    out = bn(conv(out, w2), g2, b2)
    return jax.nn.relu(out + x)


if __name__ == "__main__":
    N, C, L = 2, 8, 16          # inplanes = planes = 8, batch = 2, sequence length = 16
    key = jax.random.PRNGKey(0)
    kx, k1, k2, kg1, kb1, kg2, kb2 = jax.random.split(key, 7)

    x = jax.random.normal(kx, (N, C, L), jnp.float32)
    w1 = jax.random.normal(k1, (C, C, 3), jnp.float32) * 0.1    # conv1 weight (Cout, Cin, K)
    w2 = jax.random.normal(k2, (C, C, 3), jnp.float32) * 0.1    # conv2 weight
    g1 = 1.0 + 0.1 * jax.random.normal(kg1, (C,), jnp.float32)  # bn1 weight
    b1 = 0.1 * jax.random.normal(kb1, (C,), jnp.float32)        # bn1 bias
    g2 = 1.0 + 0.1 * jax.random.normal(kg2, (C,), jnp.float32)  # bn2 weight
    b2 = 0.1 * jax.random.normal(kb2, (C,), jnp.float32)        # bn2 bias

    y_ref = jax.block_until_ready(ref_basic_block(x, w1, g1, b1, w2, g2, b2))

    # exact path: f32 compute, block_n=1 / block_l=8 exercise multi-step grids (2,) and (2,2)
    f_f32 = jax.jit(functools.partial(basic_block, compute_dtype=jnp.float32,
                                      block_n=1, block_l=8))
    y_f32 = jax.block_until_ready(f_f32(x, w1, g1, b1, w2, g2, b2))
    np.testing.assert_allclose(np.asarray(y_f32), np.asarray(y_ref), rtol=2e-3, atol=2e-3)

    # default path: bf16 inter-pass activations, automatic VMEM-aware tile selection
    f_def = jax.jit(basic_block)
    y_bf16 = jax.block_until_ready(f_def(x, w1, g1, b1, w2, g2, b2))
    np.testing.assert_allclose(np.asarray(y_bf16), np.asarray(y_ref), rtol=1e-1, atol=1e-1)

    print("KERNEL_OK")
</pallas_src>

<mosaic_0001>
module attributes {stable_mosaic.version = 11 : i64} {
  func.func @_conv3_bnstats_kernel(%arg0: i32, %arg1: memref<1x16x128xf32, #tpu.memory_space<vmem>>, %arg2: memref<3x128x128xf32, #tpu.memory_space<vmem>>, %arg3: memref<1x16x128xf32, #tpu.memory_space<vmem>>, %arg4: memref<1x8x128xf32, #tpu.memory_space<vmem>>) attributes {dimension_semantics = [#tpu.dimension_semantics<parallel>], iteration_bounds = array<i64: 2>, scalar_prefetch = 0 : i64, scratch_operands = 0 : i64, tpu.core_type = #tpu.core_type<tc>, window_params = [{transform_indices = @transform_0, window_bounds = array<i64: 1, 16, 128>}, {pipeline_mode = #tpu.pipeline_mode<synchronous>, transform_indices = @transform_1, window_bounds = array<i64: 3, 128, 128>}, {transform_indices = @transform_2, window_bounds = array<i64: 1, 16, 128>}, {transform_indices = @transform_3, window_bounds = array<i64: 1, 8, 128>}]} {
    %c0 = arith.constant 0 : index
    %c0_0 = arith.constant 0 : index
    %c0_1 = arith.constant 0 : index
    %0 = vector.load %arg1[%c0, %c0_0, %c0_1] : memref<1x16x128xf32, #tpu.memory_space<vmem>>, vector<1x16x128xf32>
    %cst = arith.constant 0.000000e+00 : f32
    %1 = vector.broadcast %cst : f32 to vector<1x1x128xf32>
    %2 = vector.extract_strided_slice %0 {offsets = [0, 0, 0], sizes = [1, 15, 128], strides = [1, 1, 1]} : vector<1x16x128xf32> to vector<1x15x128xf32>
    %3 = tpu.concatenate %1, %2 in 1 : vector<1x1x128xf32>, vector<1x15x128xf32> -> vector<1x16x128xf32>
    %4 = vector.extract_strided_slice %0 {offsets = [0, 1, 0], sizes = [1, 15, 128], strides = [1, 1, 1]} : vector<1x16x128xf32> to vector<1x15x128xf32>
    %5 = tpu.concatenate %4, %1 in 1 : vector<1x15x128xf32>, vector<1x1x128xf32> -> vector<1x16x128xf32>
    %c0_2 = arith.constant 0 : index
    %c0_3 = arith.constant 0 : index
    %c0_4 = arith.constant 0 : index
    %6 = vector.load %arg2[%c0_2, %c0_3, %c0_4] : memref<3x128x128xf32, #tpu.memory_space<vmem>>, vector<1x128x128xf32>
    %7 = vector.shape_cast %6 : vector<1x128x128xf32> to vector<128x128xf32>
    %cst_5 = arith.constant dense<0.000000e+00> : vector<1x16x128xf32>
    %8 = tpu.matmul %3, %7, %cst_5 {dimension_numbers = #tpu.dot_dimension_numbers<[2], [0], [0, 1], [1], [0, 0, 0, 1, 1, 1], [], []>} : vector<1x16x128xf32>, vector<128x128xf32>, vector<1x16x128xf32> -> vector<1x16x128xf32>
    %c1 = arith.constant 1 : index
    %c0_6 = arith.constant 0 : index
    %c0_7 = arith.constant 0 : index
    %9 = vector.load %arg2[%c1, %c0_6, %c0_7] : memref<3x128x128xf32, #tpu.memory_space<vmem>>, vector<1x128x128xf32>
    %10 = vector.shape_cast %9 : vector<1x128x128xf32> to vector<128x128xf32>
    %cst_8 = arith.constant dense<0.000000e+00> : vector<1x16x128xf32>
    %11 = tpu.matmul %0, %10, %cst_8 {dimension_numbers = #tpu.dot_dimension_numbers<[2], [0], [0, 1], [1], [0, 0, 0, 1, 1, 1], [], []>} : vector<1x16x128xf32>, vector<128x128xf32>, vector<1x16x128xf32> -> vector<1x16x128xf32>
    %12 = arith.addf %8, %11 : vector<1x16x128xf32>
    %c2 = arith.constant 2 : index
    %c0_9 = arith.constant 0 : index
    %c0_10 = arith.constant 0 : index
    %13 = vector.load %arg2[%c2, %c0_9, %c0_10] : memref<3x128x128xf32, #tpu.memory_space<vmem>>, vector<1x128x128xf32>
    %14 = vector.shape_cast %13 : vector<1x128x128xf32> to vector<128x128xf32>
    %cst_11 = arith.constant dense<0.000000e+00> : vector<1x16x128xf32>
    %15 = tpu.matmul %5, %14, %cst_11 {dimension_numbers = #tpu.dot_dimension_numbers<[2], [0], [0, 1], [1], [0, 0, 0, 1, 1, 1], [], []>} : vector<1x16x128xf32>, vector<128x128xf32>, vector<1x16x128xf32> -> vector<1x16x128xf32>
    %16 = arith.addf %12, %15 : vector<1x16x128xf32>
    %c0_12 = arith.constant 0 : index
    %c0_13 = arith.constant 0 : index
    %c0_14 = arith.constant 0 : index
    %17 = vector.load %arg3[%c0_12, %c0_13, %c0_14] : memref<1x16x128xf32, #tpu.memory_space<vmem>>, vector<1x16x128xf32>
    tpu.vector_store %arg3[%c0_12, %c0_13, %c0_14], %16 {strides = array<i32>} : memref<1x16x128xf32, #tpu.memory_space<vmem>>, vector<1x16x128xf32>,
    %cst_15 = arith.constant dense<0.000000e+00> : vector<128xf32>
    %18 = vector.multi_reduction <add>, %16, %cst_15 [0, 1] : vector<1x16x128xf32> to vector<128xf32>
    %19 = vector.shape_cast %18 : vector<128xf32> to vector<1x1x128xf32>
    %cst_16 = arith.constant 6.250000e-02 : f32
    %20 = vector.broadcast %cst_16 : f32 to vector<1x1x128xf32>
    %21 = arith.mulf %19, %20 : vector<1x1x128xf32>
    %22 = vector.broadcast %21 : vector<1x1x128xf32> to vector<1x16x128xf32>
    %23 = arith.subf %16, %22 : vector<1x16x128xf32>
    %24 = arith.mulf %23, %23 : vector<1x16x128xf32>
    %cst_17 = arith.constant dense<0.000000e+00> : vector<128xf32>
    %25 = vector.multi_reduction <add>, %24, %cst_17 [0, 1] : vector<1x16x128xf32> to vector<128xf32>
    %26 = vector.shape_cast %25 : vector<128xf32> to vector<1x1x128xf32>
    %cst_18 = arith.constant 0.000000e+00 : f32
    %27 = vector.broadcast %cst_18 : f32 to vector<1x6x128xf32>
    %28 = tpu.concatenate %19, %26, %27 in 1 : vector<1x1x128xf32>, vector<1x1x128xf32>, vector<1x6x128xf32> -> vector<1x8x128xf32>
    %c0_19 = arith.constant 0 : index
    %c0_20 = arith.constant 0 : index
    %c0_21 = arith.constant 0 : index
    %29 = vector.load %arg4[%c0_19, %c0_20, %c0_21] : memref<1x8x128xf32, #tpu.memory_space<vmem>>, vector<1x8x128xf32>
    tpu.vector_store %arg4[%c0_19, %c0_20, %c0_21], %28 {strides = array<i32>} : memref<1x8x128xf32, #tpu.memory_space<vmem>>, vector<1x8x128xf32>,
    return
  }
  func.func @transform_0(%arg0: i32) -> (i32, i32, i32) {
    %c0_i32 = arith.constant 0 : i32
    %c0_i32_0 = arith.constant 0 : i32
    %c0_i32_1 = arith.constant 0 : i32
    return %arg0, %c0_i32, %c0_i32_0 : i32, i32, i32
  }
  func.func @transform_1(%arg0: i32) -> (i32, i32, i32) {
    %c0_i32 = arith.constant 0 : i32
    %c0_i32_0 = arith.constant 0 : i32
    %c0_i32_1 = arith.constant 0 : i32
    %c0_i32_2 = arith.constant 0 : i32
    return %c0_i32, %c0_i32_0, %c0_i32_1 : i32, i32, i32
  }
  func.func @transform_2(%arg0: i32) -> (i32, i32, i32) {
    %c0_i32 = arith.constant 0 : i32
    %c0_i32_0 = arith.constant 0 : i32
    %c0_i32_1 = arith.constant 0 : i32
    return %arg0, %c0_i32, %c0_i32_0 : i32, i32, i32
  }
  func.func @transform_3(%arg0: i32) -> (i32, i32, i32) {
    %c0_i32 = arith.constant 0 : i32
    %c0_i32_0 = arith.constant 0 : i32
    %c0_i32_1 = arith.constant 0 : i32
    return %arg0, %c0_i32, %c0_i32_0 : i32, i32, i32
  }
}

module attributes {stable_mosaic.version = 11 : i64} {
  func.func @_bn_relu_conv3_bnstats_kernel(%arg0: i32, %arg1: memref<1x16x128xf32, #tpu.memory_space<vmem>>, %arg2: memref<1x128xf32, #tpu.memory_space<vmem>>, %arg3: memref<1x128xf32, #tpu.memory_space<vmem>>, %arg4: memref<3x128x128xf32, #tpu.memory_space<vmem>>, %arg5: memref<1x16x128xf32, #tpu.memory_space<vmem>>, %arg6: memref<1x8x128xf32, #tpu.memory_space<vmem>>) attributes {dimension_semantics = [#tpu.dimension_semantics<parallel>], iteration_bounds = array<i64: 2>, scalar_prefetch = 0 : i64, scratch_operands = 0 : i64, tpu.core_type = #tpu.core_type<tc>, window_params = [{transform_indices = @transform_0, window_bounds = array<i64: 1, 16, 128>}, {pipeline_mode = #tpu.pipeline_mode<synchronous>, transform_indices = @transform_1, window_bounds = array<i64: 1, 128>}, {pipeline_mode = #tpu.pipeline_mode<synchronous>, transform_indices = @transform_2, window_bounds = array<i64: 1, 128>}, {pipeline_mode = #tpu.pipeline_mode<synchronous>, transform_indices = @transform_3, window_bounds = array<i64: 3, 128, 128>}, {transform_indices = @transform_4, window_bounds = array<i64: 1, 16, 128>}, {transform_indices = @transform_5, window_bounds = array<i64: 1, 8, 128>}]} {
    %c0 = arith.constant 0 : index
    %c0_0 = arith.constant 0 : index
    %0 = vector.load %arg2[%c0, %c0_0] : memref<1x128xf32, #tpu.memory_space<vmem>>, vector<1x128xf32>
    %1 = vector.shape_cast %0 : vector<1x128xf32> to vector<1x1x128xf32>
    %c0_1 = arith.constant 0 : index
    %c0_2 = arith.constant 0 : index
    %2 = vector.load %arg3[%c0_1, %c0_2] : memref<1x128xf32, #tpu.memory_space<vmem>>, vector<1x128xf32>
    %3 = vector.shape_cast %2 : vector<1x128xf32> to vector<1x1x128xf32>
    %c0_3 = arith.constant 0 : index
    %c0_4 = arith.constant 0 : index
    %c0_5 = arith.constant 0 : index
    %4 = vector.load %arg1[%c0_3, %c0_4, %c0_5] : memref<1x16x128xf32, #tpu.memory_space<vmem>>, vector<1x16x128xf32>
    %5 = vector.broadcast %1 : vector<1x1x128xf32> to vector<1x16x128xf32>
    %6 = arith.mulf %4, %5 : vector<1x16x128xf32>
    %7 = vector.broadcast %3 : vector<1x1x128xf32> to vector<1x16x128xf32>
    %8 = arith.addf %6, %7 : vector<1x16x128xf32>
    %cst = arith.constant 0.000000e+00 : f32
    %9 = vector.broadcast %cst : f32 to vector<1x16x128xf32>
    %10 = arith.maximumf %8, %9 : vector<1x16x128xf32>
    %cst_6 = arith.constant 0.000000e+00 : f32
    %11 = vector.broadcast %cst_6 : f32 to vector<1x1x128xf32>
    %12 = vector.extract_strided_slice %10 {offsets = [0, 0, 0], sizes = [1, 15, 128], strides = [1, 1, 1]} : vector<1x16x128xf32> to vector<1x15x128xf32>
    %13 = tpu.concatenate %11, %12 in 1 : vector<1x1x128xf32>, vector<1x15x128xf32> -> vector<1x16x128xf32>
    %14 = vector.extract_strided_slice %10 {offsets = [0, 1, 0], sizes = [1, 15, 128], strides = [1, 1, 1]} : vector<1x16x128xf32> to vector<1x15x128xf32>
    %15 = tpu.concatenate %14, %11 in 1 : vector<1x15x128xf32>, vector<1x1x128xf32> -> vector<1x16x128xf32>
    %c0_7 = arith.constant 0 : index
    %c0_8 = arith.constant 0 : index
    %c0_9 = arith.constant 0 : index
    %16 = vector.load %arg4[%c0_7, %c0_8, %c0_9] : memref<3x128x128xf32, #tpu.memory_space<vmem>>, vector<1x128x128xf32>
    %17 = vector.shape_cast %16 : vector<1x128x128xf32> to vector<128x128xf32>
    %cst_10 = arith.constant dense<0.000000e+00> : vector<1x16x128xf32>
    %18 = tpu.matmul %13, %17, %cst_10 {dimension_numbers = #tpu.dot_dimension_numbers<[2], [0], [0, 1], [1], [0, 0, 0, 1, 1, 1], [], []>} : vector<1x16x128xf32>, vector<128x128xf32>, vector<1x16x128xf32> -> vector<1x16x128xf32>
    %c1 = arith.constant 1 : index
    %c0_11 = arith.constant 0 : index
    %c0_12 = arith.constant 0 : index
    %19 = vector.load %arg4[%c1, %c0_11, %c0_12] : memref<3x128x128xf32, #tpu.memory_space<vmem>>, vector<1x128x128xf32>
    %20 = vector.shape_cast %19 : vector<1x128x128xf32> to vector<128x128xf32>
    %cst_13 = arith.constant dense<0.000000e+00> : vector<1x16x128xf32>
    %21 = tpu.matmul %10, %20, %cst_13 {dimension_numbers = #tpu.dot_dimension_numbers<[2], [0], [0, 1], [1], [0, 0, 0, 1, 1, 1], [], []>} : vector<1x16x128xf32>, vector<128x128xf32>, vector<1x16x128xf32> -> vector<1x16x128xf32>
    %22 = arith.addf %18, %21 : vector<1x16x128xf32>
    %c2 = arith.constant 2 : index
    %c0_14 = arith.constant 0 : index
    %c0_15 = arith.constant 0 : index
    %23 = vector.load %arg4[%c2, %c0_14, %c0_15] : memref<3x128x128xf32, #tpu.memory_space<vmem>>, vector<1x128x128xf32>
    %24 = vector.shape_cast %23 : vector<1x128x128xf32> to vector<128x128xf32>
    %cst_16 = arith.constant dense<0.000000e+00> : vector<1x16x128xf32>
    %25 = tpu.matmul %15, %24, %cst_16 {dimension_numbers = #tpu.dot_dimension_numbers<[2], [0], [0, 1], [1], [0, 0, 0, 1, 1, 1], [], []>} : vector<1x16x128xf32>, vector<128x128xf32>, vector<1x16x128xf32> -> vector<1x16x128xf32>
    %26 = arith.addf %22, %25 : vector<1x16x128xf32>
    %c0_17 = arith.constant 0 : index
    %c0_18 = arith.constant 0 : index
    %c0_19 = arith.constant 0 : index
    %27 = vector.load %arg5[%c0_17, %c0_18, %c0_19] : memref<1x16x128xf32, #tpu.memory_space<vmem>>, vector<1x16x128xf32>
    tpu.vector_store %arg5[%c0_17, %c0_18, %c0_19], %26 {strides = array<i32>} : memref<1x16x128xf32, #tpu.memory_space<vmem>>, vector<1x16x128xf32>,
    %cst_20 = arith.constant dense<0.000000e+00> : vector<128xf32>
    %28 = vector.multi_reduction <add>, %26, %cst_20 [0, 1] : vector<1x16x128xf32> to vector<128xf32>
    %29 = vector.shape_cast %28 : vector<128xf32> to vector<1x1x128xf32>
    %cst_21 = arith.constant 6.250000e-02 : f32
    %30 = vector.broadcast %cst_21 : f32 to vector<1x1x128xf32>
    %31 = arith.mulf %29, %30 : vector<1x1x128xf32>
    %32 = vector.broadcast %31 : vector<1x1x128xf32> to vector<1x16x128xf32>
    %33 = arith.subf %26, %32 : vector<1x16x128xf32>
    %34 = arith.mulf %33, %33 : vector<1x16x128xf32>
    %cst_22 = arith.constant dense<0.000000e+00> : vector<128xf32>
    %35 = vector.multi_reduction <add>, %34, %cst_22 [0, 1] : vector<1x16x128xf32> to vector<128xf32>
    %36 = vector.shape_cast %35 : vector<128xf32> to vector<1x1x128xf32>
    %cst_23 = arith.constant 0.000000e+00 : f32
    %37 = vector.broadcast %cst_23 : f32 to vector<1x6x128xf32>
    %38 = tpu.concatenate %29, %36, %37 in 1 : vector<1x1x128xf32>, vector<1x1x128xf32>, vector<1x6x128xf32> -> vector<1x8x128xf32>
    %c0_24 = arith.constant 0 : index
    %c0_25 = arith.constant 0 : index
    %c0_26 = arith.constant 0 : index
    %39 = vector.load %arg6[%c0_24, %c0_25, %c0_26] : memref<1x8x128xf32, #tpu.memory_space<vmem>>, vector<1x8x128xf32>
    tpu.vector_store %arg6[%c0_24, %c0_25, %c0_26], %38 {strides = array<i32>} : memref<1x8x128xf32, #tpu.memory_space<vmem>>, vector<1x8x128xf32>,
    return
  }
  func.func @transform_0(%arg0: i32) -> (i32, i32, i32) {
    %c0_i32 = arith.constant 0 : i32
    %c0_i32_0 = arith.constant 0 : i32
    %c0_i32_1 = arith.constant 0 : i32
    return %arg0, %c0_i32, %c0_i32_0 : i32, i32, i32
  }
  func.func @transform_1(%arg0: i32) -> (i32, i32) {
    %c0_i32 = arith.constant 0 : i32
    %c0_i32_0 = arith.constant 0 : i32
    %c0_i32_1 = arith.constant 0 : i32
    return %c0_i32, %c0_i32_0 : i32, i32
  }
  func.func @transform_2(%arg0: i32) -> (i32, i32) {
    %c0_i32 = arith.constant 0 : i32
    %c0_i32_0 = arith.constant 0 : i32
    %c0_i32_1 = arith.constant 0 : i32
    return %c0_i32, %c0_i32_0 : i32, i32
  }
  func.func @transform_3(%arg0: i32) -> (i32, i32, i32) {
    %c0_i32 = arith.constant 0 : i32
    %c0_i32_0 = arith.constant 0 : i32
    %c0_i32_1 = arith.constant 0 : i32
    %c0_i32_2 = arith.constant 0 : i32
    return %c0_i32, %c0_i32_0, %c0_i32_1 : i32, i32, i32
  }
  func.func @transform_4(%arg0: i32) -> (i32, i32, i32) {
    %c0_i32 = arith.constant 0 : i32
    %c0_i32_0 = arith.constant 0 : i32
    %c0_i32_1 = arith.constant 0 : i32
    return %arg0, %c0_i32, %c0_i32_0 : i32, i32, i32
  }
  func.func @transform_5(%arg0: i32) -> (i32, i32, i32) {
    %c0_i32 = arith.constant 0 : i32
    %c0_i32_0 = arith.constant 0 : i32
    %c0_i32_1 = arith.constant 0 : i32
    return %arg0, %c0_i32, %c0_i32_0 : i32, i32, i32
  }
}

module attributes {stable_mosaic.version = 11 : i64} {
  func.func @_bn_add_relu_kernel(%arg0: i32, %arg1: i32, %arg2: memref<1x8x128xf32, #tpu.memory_space<vmem>>, %arg3: memref<1x8x128xf32, #tpu.memory_space<vmem>>, %arg4: memref<1x128xf32, #tpu.memory_space<vmem>>, %arg5: memref<1x128xf32, #tpu.memory_space<vmem>>, %arg6: memref<1x8x128xf32, #tpu.memory_space<vmem>>) attributes {dimension_semantics = [#tpu.dimension_semantics<parallel>, #tpu.dimension_semantics<parallel>], iteration_bounds = array<i64: 2, 2>, scalar_prefetch = 0 : i64, scratch_operands = 0 : i64, tpu.core_type = #tpu.core_type<tc>, window_params = [{transform_indices = @transform_0, window_bounds = array<i64: 1, 8, 128>}, {transform_indices = @transform_1, window_bounds = array<i64: 1, 8, 128>}, {pipeline_mode = #tpu.pipeline_mode<synchronous>, transform_indices = @transform_2, window_bounds = array<i64: 1, 128>}, {pipeline_mode = #tpu.pipeline_mode<synchronous>, transform_indices = @transform_3, window_bounds = array<i64: 1, 128>}, {transform_indices = @transform_4, window_bounds = array<i64: 1, 8, 128>}]} {
    %c0 = arith.constant 0 : index
    %c0_0 = arith.constant 0 : index
    %0 = vector.load %arg4[%c0, %c0_0] : memref<1x128xf32, #tpu.memory_space<vmem>>, vector<1x128xf32>
    %1 = vector.shape_cast %0 : vector<1x128xf32> to vector<1x1x128xf32>
    %c0_1 = arith.constant 0 : index
    %c0_2 = arith.constant 0 : index
    %2 = vector.load %arg5[%c0_1, %c0_2] : memref<1x128xf32, #tpu.memory_space<vmem>>, vector<1x128xf32>
    %3 = vector.shape_cast %2 : vector<1x128xf32> to vector<1x1x128xf32>
    %c0_3 = arith.constant 0 : index
    %c0_4 = arith.constant 0 : index
    %c0_5 = arith.constant 0 : index
    %4 = vector.load %arg2[%c0_3, %c0_4, %c0_5] : memref<1x8x128xf32, #tpu.memory_space<vmem>>, vector<1x8x128xf32>
    %5 = vector.broadcast %1 : vector<1x1x128xf32> to vector<1x8x128xf32>
    %6 = arith.mulf %4, %5 : vector<1x8x128xf32>
    %7 = vector.broadcast %3 : vector<1x1x128xf32> to vector<1x8x128xf32>
    %8 = arith.addf %6, %7 : vector<1x8x128xf32>
    %c0_6 = arith.constant 0 : index
    %c0_7 = arith.constant 0 : index
    %c0_8 = arith.constant 0 : index
    %9 = vector.load %arg3[%c0_6, %c0_7, %c0_8] : memref<1x8x128xf32, #tpu.memory_space<vmem>>, vector<1x8x128xf32>
    %10 = arith.addf %8, %9 : vector<1x8x128xf32>
    %cst = arith.constant 0.000000e+00 : f32
    %11 = vector.broadcast %cst : f32 to vector<1x8x128xf32>
    %12 = arith.maximumf %10, %11 : vector<1x8x128xf32>
    %c0_9 = arith.constant 0 : index
    %c0_10 = arith.constant 0 : index
    %c0_11 = arith.constant 0 : index
    %13 = vector.load %arg6[%c0_9, %c0_10, %c0_11] : memref<1x8x128xf32, #tpu.memory_space<vmem>>, vector<1x8x128xf32>
    tpu.vector_store %arg6[%c0_9, %c0_10, %c0_11], %12 {strides = array<i32>} : memref<1x8x128xf32, #tpu.memory_space<vmem>>, vector<1x8x128xf32>,
    return
  }
  func.func @transform_0(%arg0: i32, %arg1: i32) -> (i32, i32, i32) {
    %c0_i32 = arith.constant 0 : i32
    %c0_i32_0 = arith.constant 0 : i32
    return %arg0, %arg1, %c0_i32 : i32, i32, i32
  }
  func.func @transform_1(%arg0: i32, %arg1: i32) -> (i32, i32, i32) {
    %c0_i32 = arith.constant 0 : i32
    %c0_i32_0 = arith.constant 0 : i32
    return %arg0, %arg1, %c0_i32 : i32, i32, i32
  }
  func.func @transform_2(%arg0: i32, %arg1: i32) -> (i32, i32) {
    %c0_i32 = arith.constant 0 : i32
    %c0_i32_0 = arith.constant 0 : i32
    %c0_i32_1 = arith.constant 0 : i32
    return %c0_i32, %c0_i32_0 : i32, i32
  }
  func.func @transform_3(%arg0: i32, %arg1: i32) -> (i32, i32) {
    %c0_i32 = arith.constant 0 : i32
    %c0_i32_0 = arith.constant 0 : i32
    %c0_i32_1 = arith.constant 0 : i32
    return %c0_i32, %c0_i32_0 : i32, i32
  }
  func.func @transform_4(%arg0: i32, %arg1: i32) -> (i32, i32, i32) {
    %c0_i32 = arith.constant 0 : i32
    %c0_i32_0 = arith.constant 0 : i32
    return %arg0, %arg1, %c0_i32 : i32, i32, i32
  }
}

</mosaic_0001>

<llo_original>
// kernel: basic_block.5
$region0: #{basic_block.5}
  #allocation0 [shape = 'u32[]', space=smem, size = 0x4, offset = 0x4, fixed_abs, tag = 'smem constant byte address 0x4 - core index']
  #allocation1 [shape = 'u32[72,128]{1,0:T(1,128)}', space=vmem, size = 0x9000, scoped, tag = 'internal scratch']
  %s0 = inlined_call_operand.vmem [shape: f32[2,16,128], index: 0, kind: input, shape index: {}, may-alias: {0,4}]
  %s1 = inlined_call_operand.vmem [shape: f32[2,16,128], index: 1, kind: input, shape index: {}]
  %s2 = inlined_call_operand.vmem [shape: f32[1,128], index: 2, kind: input, shape index: {}]
  %s3 = inlined_call_operand.vmem [shape: f32[1,128], index: 3, kind: input, shape index: {}]
  %s4 = inlined_call_operand.vmem [shape: f32[2,16,128], index: 4, kind: output, shape index: {}, may-alias: {0,4}]
  %s5 = sld [smem:[#allocation0]]
  $region49: #{basic_block.5} parent=0
    _
  %s7 = ssub.s32 1, %s5
  %s8 = scalar_select 0, %s7, %s5
  loop: start=0, step=1, limit=6
  $region2: #{basic_block.5} parent=0 // loop_pre_header
    _
  $region3: #{basic_block.5} parent=0 // loop_header
    %s10 = sphi 0, %s14
    %p11 = scmp.ge.s32.totalorder %s10, 6
    %s17 = sphi 0, %s29
    %s18 = sphi 0, %s25
    %s19 = sphi 0, %s17
    %s20 = sphi 0, %s18
    %s21 = sphi 0, %s19
    %s22 = sphi 0, %s20
    %s34 = sphi 0, %s36
    %s37 = sphi 0, %s34
    %s38 = sphi 0, %s37
    %s54 = sphi 0, %s38
    %s62 = sphi 0, %s64
    %s65 = sphi 0, %s62
    %s66 = sphi 0, %s65
    %s82 = sphi 0, %s66
    %s86 = sphi 0, %s86
    %s88 = sphi 0, %s86
    %s89 = sphi 0, %s88
    %s103 = sphi 0, %s89
    %s107 = sphi 0, %s107
    %s109 = sphi 0, %s107
    %s110 = sphi 0, %s109
    %s124 = sphi 0, %s110
    %s132 = sphi 0, %s134
    %s135 = sphi 0, %s132
    %s136 = sphi 0, %s135
    %s152 = sphi 0, %s136
  $region4: #{basic_block.5} parent=0 // loop_header_branch
    %13 = sbr.rel (%p11) target = $region8
  $region5: #{basic_block.5} parent=0 // loop_body
    %s15 = ssub.s32 %s10, 1
    %s16 = ssub.s32 %s10, 2
    %s23 = sadd.s32 1, %s18
    %p24 = scmp.ge.s32.totalorder %s23, 2
    %s25 = scalar_select %p24, 0, %s23
    %s26 = sadd.s32 1, %s17
    %s27 = scalar_select %p24, %s26, %s17
    %p28 = scmp.ge.s32.totalorder %s27, 2
    %s29 = scalar_select %p28, 0, %s27
    %s30 = ssub.s32 %s17, %s29
    %s31 = ssub.s32 %s18, %s25
    %s32 = sor.u32 %s30, %s31
    %p33 = scmp.eq.s32.totalorder %s32, 0
    %s35 = sadd.s32 %s34, 1
    %s36 = scalar_select %p33, %s34, %s35
    %p39 = pneg %p33
    %p40 = scmp.eq.s32.totalorder %s10, 3
    %p41 = por %p39, %p40
    %p42 = scmp.ne.s32.totalorder %s34, %s37
    %p43 = scmp.eq.s32.totalorder %s10, 0
    %p44 = por %p42, %p43
    %p45 = scmp.ne.s32.totalorder %s34, %s37
    %p46 = scmp.eq.s32.totalorder %s15, 3
    %p47 = por %p45, %p46
    %p48 = scmp.ne.s32.totalorder %s37, %s38
    %p49 = scmp.eq.s32.totalorder %s15, 0
    %p50 = por %p48, %p49
    %p51 = scmp.ne.s32.totalorder %s37, %s38
    %p52 = scmp.eq.s32.totalorder %s16, 3
    %p53 = por %p51, %p52
    %p55 = scmp.ne.s32.totalorder %s38, %s54
    %p56 = scmp.eq.s32.totalorder %s16, 0
    %p57 = por %p55, %p56
    %s58 = ssub.s32 %s17, %s29
    %s59 = ssub.s32 %s18, %s25
    %s60 = sor.u32 %s58, %s59
    %p61 = scmp.eq.s32.totalorder %s60, 0
    %s63 = sadd.s32 %s62, 1
    %s64 = scalar_select %p61, %s62, %s63
    %p67 = pneg %p61
    %p68 = scmp.eq.s32.totalorder %s10, 3
    %p69 = por %p67, %p68
    %p70 = scmp.ne.s32.totalorder %s62, %s65
    %p71 = scmp.eq.s32.totalorder %s10, 0
    %p72 = por %p70, %p71
    %p73 = scmp.ne.s32.totalorder %s62, %s65
    %p74 = scmp.eq.s32.totalorder %s15, 3
    %p75 = por %p73, %p74
    %p76 = scmp.ne.s32.totalorder %s65, %s66
    %p77 = scmp.eq.s32.totalorder %s15, 0
    %p78 = por %p76, %p77
    %p79 = scmp.ne.s32.totalorder %s65, %s66
    %p80 = scmp.eq.s32.totalorder %s16, 3
    %p81 = por %p79, %p80
    %p83 = scmp.ne.s32.totalorder %s66, %s82
    %p84 = scmp.eq.s32.totalorder %s16, 0
    %p85 = por %p83, %p84
    %s87 = sadd.s32 %s86, 1
    %p90 = scmp.eq.s32.totalorder %s10, 3
    %p91 = scmp.ne.s32.totalorder %s86, %s88
    %p92 = scmp.eq.s32.totalorder %s10, 0
    %p93 = por %p91, %p92
    %p94 = scmp.ne.s32.totalorder %s86, %s88
    %p95 = scmp.eq.s32.totalorder %s15, 3
    %p96 = por %p94, %p95
    %p97 = scmp.ne.s32.totalorder %s88, %s89
    %p98 = scmp.eq.s32.totalorder %s15, 0
    %p99 = por %p97, %p98
    %p100 = scmp.ne.s32.totalorder %s88, %s89
    %p101 = scmp.eq.s32.totalorder %s16, 3
    %p102 = por %p100, %p101
    %p104 = scmp.ne.s32.totalorder %s89, %s103
    %p105 = scmp.eq.s32.totalorder %s16, 0
    %p106 = por %p104, %p105
    %s108 = sadd.s32 %s107, 1
    %p111 = scmp.eq.s32.totalorder %s10, 3
    %p112 = scmp.ne.s32.totalorder %s107, %s109
    %p113 = scmp.eq.s32.totalorder %s10, 0
    %p114 = por %p112, %p113
    %p115 = scmp.ne.s32.totalorder %s107, %s109
    %p116 = scmp.eq.s32.totalorder %s15, 3
    %p117 = por %p115, %p116
    %p118 = scmp.ne.s32.totalorder %s109, %s110
    %p119 = scmp.eq.s32.totalorder %s15, 0
    %p120 = por %p118, %p119
    %p121 = scmp.ne.s32.totalorder %s109, %s110
    %p122 = scmp.eq.s32.totalorder %s16, 3
    %p123 = por %p121, %p122
    %p125 = scmp.ne.s32.totalorder %s110, %s124
    %p126 = scmp.eq.s32.totalorder %s16, 0
    %p127 = por %p125, %p126
    %s128 = ssub.s32 %s17, %s29
    %s129 = ssub.s32 %s18, %s25
    %s130 = sor.u32 %s128, %s129
    %p131 = scmp.eq.s32.totalorder %s130, 0
    %s133 = sadd.s32 %s132, 1
    %s134 = scalar_select %p131, %s132, %s133
    %p137 = pneg %p131
    %p138 = scmp.eq.s32.totalorder %s10, 3
    %p139 = por %p137, %p138
    %p140 = scmp.ne.s32.totalorder %s132, %s135
    %p141 = scmp.eq.s32.totalorder %s10, 0
    %p142 = por %p140, %p141
    %p143 = scmp.ne.s32.totalorder %s132, %s135
    %p144 = scmp.eq.s32.totalorder %s15, 3
    %p145 = por %p143, %p144
    %p146 = scmp.ne.s32.totalorder %s135, %s136
    %p147 = scmp.eq.s32.totalorder %s15, 0
    %p148 = por %p146, %p147
    %p149 = scmp.ne.s32.totalorder %s135, %s136
    %p150 = scmp.eq.s32.totalorder %s16, 3
    %p151 = por %p149, %p150
    %p153 = scmp.ne.s32.totalorder %s136, %s152
    %p154 = scmp.eq.s32.totalorder %s16, 0
    %p155 = por %p153, %p154
    %p156 = scmp.le.s32.totalorder 1, %s10
    %p157 = scmp.lt.s32.totalorder %s10, 5
    %p158 = pnand %p156, %p157
    %p159 = pneg %p158
    // Predicated region
    $region9: #{basic_block.5} parent=5 // pred_check
      _
    $region10: #{basic_block.5} parent=5 // pred_check_branch
      %161 = sbr.rel (%p158) target = $region12
    $region11: #{basic_block.5} parent=5 // pred_region
      %s162 = ssub.s32 %s10, 1
      // Predicated region
      $region13: #{basic_block.5} parent=11 // pred_check
        %p163 = pneg %p99
      $region14: #{basic_block.5} parent=11 // pred_check_branch
        %165 = sbr.rel (%p163) target = $region16
      $region15: #{basic_block.5} parent=11 // pred_region
        _
      $region16: #{basic_block.5} parent=11 // pred_fallthru
        _
      // Predicated region
      $region17: #{basic_block.5} parent=11 // pred_check
        %p166 = pneg %p120
      $region18: #{basic_block.5} parent=11 // pred_check_branch
        %168 = sbr.rel (%p166) target = $region20
      $region19: #{basic_block.5} parent=11 // pred_region
        _
      $region20: #{basic_block.5} parent=11 // pred_fallthru
        _
    $region12: #{basic_block.5} parent=5 // pred_fallthru
      _
    %p169 = scmp.lt.s32.totalorder %s10, 4
    // Predicated region
    $region21: #{basic_block.5} parent=5 // pred_check
      %p170 = pneg %p169
    $region22: #{basic_block.5} parent=5 // pred_check_branch
      %172 = sbr.rel (%p170) target = $region24
    $region23: #{basic_block.5} parent=5 // pred_region
      // Predicated region
      $region25: #{basic_block.5} parent=23 // pred_check
        %p173 = pneg %p44
      $region26: #{basic_block.5} parent=23 // pred_check_branch
        %175 = sbr.rel (%p173) target = $region28
      $region27: #{basic_block.5} parent=23 // pred_region
        %p176 = scmp.lt.s32.totalorder %s17, 1
        %s177 = scalar_select %p176, %s17, 1
        %p178 = scmp.lt.s32.totalorder %s18, 1
        %s179 = scalar_select %p178, %s18, 1
        %s180 = smul.addr %s177, 2
        %s181 = sadd.s32 %s179, %s180
        %s182 = smul.addr %s181, 8
        %s183 = scalar_lea.vmem %s0, %s182
      $region28: #{basic_block.5} parent=23 // pred_fallthru
        _
      // Predicated region
      $region29: #{basic_block.5} parent=23 // pred_check
        %p184 = pneg %p72
      $region30: #{basic_block.5} parent=23 // pred_check_branch
        %186 = sbr.rel (%p184) target = $region32
      $region31: #{basic_block.5} parent=23 // pred_region
        %p187 = scmp.lt.s32.totalorder %s17, 1
        %s188 = scalar_select %p187, %s17, 1
        %p189 = scmp.lt.s32.totalorder %s18, 1
        %s190 = scalar_select %p189, %s18, 1
        %s191 = smul.addr %s188, 2
        %s192 = sadd.s32 %s190, %s191
        %s193 = smul.addr %s192, 8
        %s194 = scalar_lea.vmem %s1, %s193
      $region32: #{basic_block.5} parent=23 // pred_fallthru
        _
    $region24: #{basic_block.5} parent=5 // pred_fallthru
      _
    %p195 = scmp.le.s32.totalorder 1, %s10
    %p196 = scmp.lt.s32.totalorder %s10, 5
    %p197 = pnand %p195, %p196
    %p198 = pneg %p197
    // Predicated region
    $region33: #{basic_block.5} parent=5 // pred_check
      _
    $region34: #{basic_block.5} parent=5 // pred_check_branch
      %200 = sbr.rel (%p197) target = $region36
    $region35: #{basic_block.5} parent=5 // pred_region
      %s201 = ssub.s32 %s10, 1
      %p202 = scmp.lt.s32.totalorder %s19, 1
      %s203 = scalar_select %p202, %s19, 1
      %p204 = scmp.lt.s32.totalorder %s20, 1
      %s205 = scalar_select %p204, %s20, 1
      %s206 = smul.addr %s203, 2
      %s207 = sadd.s32 %s205, %s206
      %s208 = smul.addr %s207, 8
      %s209 = scalar_lea.vmem %s0, %s208
      %p210 = pneg %p50
      %p211 = pneg %p47
      %p212 = scmp.lt.s32.totalorder %s19, 1
      %s213 = scalar_select %p212, %s19, 1
      %p214 = scmp.lt.s32.totalorder %s20, 1
      %s215 = scalar_select %p214, %s20, 1
      %s216 = smul.addr %s213, 2
      %s217 = sadd.s32 %s215, %s216
      %s218 = smul.addr %s217, 8
      %s219 = scalar_lea.vmem %s1, %s218
      %p220 = pneg %p78
      %p221 = pneg %p75
      %p222 = pneg %p99
      %p223 = pneg %p96
      %p224 = pneg %p120
      %p225 = pneg %p117
      %p226 = pneg %p148
      %p227 = pneg %p145
      %p228 = scmp.lt.s32.totalorder %s19, 1
      %s229 = scalar_select %p228, %s19, 1
      %p230 = scmp.lt.s32.totalorder %s20, 1
      %s231 = scalar_select %p230, %s20, 1
      %s232 = smul.addr %s229, 2
      %s233 = sadd.s32 %s231, %s232
      %s234 = smul.addr %s233, 8
      %s235 = scalar_lea.vmem %s4, %s234
      %p236 = scmp.lt.s32.totalorder %s19, 1
      %s237 = scalar_select %p236, %s19, 1
      %p238 = scmp.lt.s32.totalorder %s20, 1
      %s239 = scalar_select %p238, %s20, 1
      %s240 = smul.addr %s237, 2
      %s241 = sadd.s32 %s239, %s240
      %s242 = smul.addr %s241, 8
      %s243 = scalar_lea.vmem %s0, %s242
      %p244 = scmp.lt.s32.totalorder %s19, 1
      %s245 = scalar_select %p244, %s19, 1
      %p246 = scmp.lt.s32.totalorder %s20, 1
      %s247 = scalar_select %p246, %s20, 1
      %s248 = smul.addr %s245, 2
      %s249 = sadd.s32 %s247, %s248
      %s250 = smul.addr %s249, 8
      %s251 = scalar_lea.vmem %s1, %s250
      %p252 = scmp.lt.s32.totalorder %s19, 1
      %s253 = scalar_select %p252, %s19, 1
      %p254 = scmp.lt.s32.totalorder %s20, 1
      %s255 = scalar_select %p254, %s20, 1
      %s256 = smul.addr %s253, 2
      %s257 = sadd.s32 %s255, %s256
      %s258 = smul.addr %s257, 8
      %s259 = scalar_lea.vmem %s4, %s258
      %v260 = vld [vmem:[%s2] sm:$0x1]
      %v261 = vld [vmem:[%s3] sm:$0x1]
      %v262 = vld [vmem:[%s243] sm:$0xff]
      %v264 = vperm.slane %v260, 0
      %v266 = vmul.f32 %v262, %v264
      %v268 = vperm.slane %v261, 0
      %v270 = vadd.f32 %v266, %v268
      %v271 = vld [vmem:[%s251] sm:$0xff]
      %v272 = vadd.f32 %v270, %v271
      %v273 = vmax.f32 %v272, 0.0
      %274 = vst [vmem:[%s259] sm:$0xff] %v273
      %p275 = scmp.lt.s32.totalorder %s19, 1
      %s276 = scalar_select %p275, %s19, 1
      %p277 = scmp.lt.s32.totalorder %s20, 1
      %s278 = scalar_select %p277, %s20, 1
      %s279 = smul.addr %s276, 2
      %s280 = sadd.s32 %s278, %s279
      %s281 = smul.addr %s280, 8
      %s282 = scalar_lea.vmem %s4, %s281
      // Predicated region
      $region37: #{basic_block.5} parent=35 // pred_check
        %p283 = pneg %p145
      $region38: #{basic_block.5} parent=35 // pred_check_branch
        %285 = sbr.rel (%p283) target = $region40
      $region39: #{basic_block.5} parent=35 // pred_region
        _
      $region40: #{basic_block.5} parent=35 // pred_fallthru
        _
    $region36: #{basic_block.5} parent=5 // pred_fallthru
      _
    %p286 = scmp.le.s32.totalorder 2, %s10
    // Predicated region
    $region41: #{basic_block.5} parent=5 // pred_check
      %p287 = pneg %p286
    $region42: #{basic_block.5} parent=5 // pred_check_branch
      %289 = sbr.rel (%p287) target = $region44
    $region43: #{basic_block.5} parent=5 // pred_region
      %s290 = ssub.s32 %s10, 2
      // Predicated region
      $region45: #{basic_block.5} parent=43 // pred_check
        %p291 = pneg %p151
      $region46: #{basic_block.5} parent=43 // pred_check_branch
        %293 = sbr.rel (%p291) target = $region48
      $region47: #{basic_block.5} parent=43 // pred_region
        %p294 = scmp.lt.s32.totalorder %s21, 1
        %s295 = scalar_select %p294, %s21, 1
        %p296 = scmp.lt.s32.totalorder %s22, 1
        %s297 = scalar_select %p296, %s22, 1
        %s298 = smul.addr %s295, 2
        %s299 = sadd.s32 %s297, %s298
        %s300 = smul.addr %s299, 8
        %s301 = scalar_lea.vmem %s4, %s300
      $region48: #{basic_block.5} parent=43 // pred_fallthru
        _
    $region44: #{basic_block.5} parent=5 // pred_fallthru
      _
  $region6: #{basic_block.5} parent=0 // loop_footer
    %s14 = sadd.s32 1, %s10
  $region7: #{basic_block.5} parent=0 // loop_footer_branch
    %9 = sbr.rel target = $region3
  $region8: #{basic_block.5} parent=0 // loop_exit
    _

// kernel: basic_block.3
$region0: #{basic_block.3}
  #allocation0 [shape = 'u32[]', space=smem, size = 0x4, offset = 0x4, fixed_abs, tag = 'smem constant byte address 0x4 - core index']
  #allocation1 [shape = 'u32[72,128]{1,0:T(1,128)}', space=vmem, size = 0x9000, scoped, tag = 'internal scratch']
  %s0 = inlined_call_operand.vmem [shape: f32[2,16,128], index: 0, kind: input, shape index: {}]
  %s1 = inlined_call_operand.vmem [shape: f32[3,128,128], index: 1, kind: input, shape index: {}]
  %s2 = inlined_call_operand.vmem [shape: f32[2,16,128], index: 2, kind: output, shape index: {0}]
  %s3 = inlined_call_operand.vmem [shape: f32[2,8,128], index: 3, kind: output, shape index: {1}]
  %4 = xla_tuple %s2, %s3
  %s5 = sld [smem:[#allocation0]]
  $region49: #{basic_block.3} parent=0
    _
  %s7 = ssub.s32 1, %s5
  %s8 = scalar_select 0, %s7, %s5
  loop: start=0, step=1, limit=4
  $region2: #{basic_block.3} parent=0 // loop_pre_header
    _
  $region3: #{basic_block.3} parent=0 // loop_header
    %s10 = sphi 0, %s14
    %p11 = scmp.ge.s32.totalorder %s10, 4
    %s20 = sphi 0, %s22
    %s23 = sphi 0, %s20
    %s24 = sphi 0, %s23
    %s40 = sphi 0, %s24
    %s44 = sphi 0, %s44
    %s46 = sphi 0, %s44
    %s47 = sphi 0, %s46
    %s61 = sphi 0, %s47
    %s67 = sphi 0, %s69
    %s70 = sphi 0, %s67
    %s71 = sphi 0, %s70
    %s87 = sphi 0, %s71
    %s93 = sphi 0, %s95
    %s96 = sphi 0, %s93
    %s97 = sphi 0, %s96
    %s113 = sphi 0, %s97
  $region4: #{basic_block.3} parent=0 // loop_header_branch
    %13 = sbr.rel (%p11) target = $region8
  $region5: #{basic_block.3} parent=0 // loop_body
    %s15 = ssub.s32 %s10, 1
    %s16 = ssub.s32 %s10, 2
    %s17 = sadd.s32 %s10, 1
    %s18 = ssub.s32 %s10, %s17
    %p19 = scmp.eq.s32.totalorder %s18, 0
    %s21 = sadd.s32 %s20, 1
    %s22 = scalar_select %p19, %s20, %s21
    %p25 = pneg %p19
    %p26 = scmp.eq.s32.totalorder %s10, 1
    %p27 = por %p25, %p26
    %p28 = scmp.ne.s32.totalorder %s20, %s23
    %p29 = scmp.eq.s32.totalorder %s10, 0
    %p30 = por %p28, %p29
    %p31 = scmp.ne.s32.totalorder %s20, %s23
    %p32 = scmp.eq.s32.totalorder %s15, 1
    %p33 = por %p31, %p32
    %p34 = scmp.ne.s32.totalorder %s23, %s24
    %p35 = scmp.eq.s32.totalorder %s15, 0
    %p36 = por %p34, %p35
    %p37 = scmp.ne.s32.totalorder %s23, %s24
    %p38 = scmp.eq.s32.totalorder %s16, 1
    %p39 = por %p37, %p38
    %p41 = scmp.ne.s32.totalorder %s24, %s40
    %p42 = scmp.eq.s32.totalorder %s16, 0
    %p43 = por %p41, %p42
    %s45 = sadd.s32 %s44, 1
    %p48 = scmp.eq.s32.totalorder %s10, 1
    %p49 = scmp.ne.s32.totalorder %s44, %s46
    %p50 = scmp.eq.s32.totalorder %s10, 0
    %p51 = por %p49, %p50
    %p52 = scmp.ne.s32.totalorder %s44, %s46
    %p53 = scmp.eq.s32.totalorder %s15, 1
    %p54 = por %p52, %p53
    %p55 = scmp.ne.s32.totalorder %s46, %s47
    %p56 = scmp.eq.s32.totalorder %s15, 0
    %p57 = por %p55, %p56
    %p58 = scmp.ne.s32.totalorder %s46, %s47
    %p59 = scmp.eq.s32.totalorder %s16, 1
    %p60 = por %p58, %p59
    %p62 = scmp.ne.s32.totalorder %s47, %s61
    %p63 = scmp.eq.s32.totalorder %s16, 0
    %p64 = por %p62, %p63
    %s65 = ssub.s32 %s10, %s17
    %p66 = scmp.eq.s32.totalorder %s65, 0
    %s68 = sadd.s32 %s67, 1
    %s69 = scalar_select %p66, %s67, %s68
    %p72 = pneg %p66
    %p73 = scmp.eq.s32.totalorder %s10, 1
    %p74 = por %p72, %p73
    %p75 = scmp.ne.s32.totalorder %s67, %s70
    %p76 = scmp.eq.s32.totalorder %s10, 0
    %p77 = por %p75, %p76
    %p78 = scmp.ne.s32.totalorder %s67, %s70
    %p79 = scmp.eq.s32.totalorder %s15, 1
    %p80 = por %p78, %p79
    %p81 = scmp.ne.s32.totalorder %s70, %s71
    %p82 = scmp.eq.s32.totalorder %s15, 0
    %p83 = por %p81, %p82
    %p84 = scmp.ne.s32.totalorder %s70, %s71
    %p85 = scmp.eq.s32.totalorder %s16, 1
    %p86 = por %p84, %p85
    %p88 = scmp.ne.s32.totalorder %s71, %s87
    %p89 = scmp.eq.s32.totalorder %s16, 0
    %p90 = por %p88, %p89
    %s91 = ssub.s32 %s10, %s17
    %p92 = scmp.eq.s32.totalorder %s91, 0
    %s94 = sadd.s32 %s93, 1
    %s95 = scalar_select %p92, %s93, %s94
    %p98 = pneg %p92
    %p99 = scmp.eq.s32.totalorder %s10, 1
    %p100 = por %p98, %p99
    %p101 = scmp.ne.s32.totalorder %s93, %s96
    %p102 = scmp.eq.s32.totalorder %s10, 0
    %p103 = por %p101, %p102
    %p104 = scmp.ne.s32.totalorder %s93, %s96
    %p105 = scmp.eq.s32.totalorder %s15, 1
    %p106 = por %p104, %p105
    %p107 = scmp.ne.s32.totalorder %s96, %s97
    %p108 = scmp.eq.s32.totalorder %s15, 0
    %p109 = por %p107, %p108
    %p110 = scmp.ne.s32.totalorder %s96, %s97
    %p111 = scmp.eq.s32.totalorder %s16, 1
    %p112 = por %p110, %p111
    %p114 = scmp.ne.s32.totalorder %s97, %s113
    %p115 = scmp.eq.s32.totalorder %s16, 0
    %p116 = por %p114, %p115
    %p117 = scmp.le.s32.totalorder 1, %s10
    %p118 = scmp.lt.s32.totalorder %s10, 3
    %p119 = pnand %p117, %p118
    %p120 = pneg %p119
    // Predicated region
    $region9: #{basic_block.3} parent=5 // pred_check
      _
    $region10: #{basic_block.3} parent=5 // pred_check_branch
      %122 = sbr.rel (%p119) target = $region12
    $region11: #{basic_block.3} parent=5 // pred_region
      %s123 = ssub.s32 %s10, 1
      // Predicated region
      $region13: #{basic_block.3} parent=11 // pred_check
        %p124 = pneg %p57
      $region14: #{basic_block.3} parent=11 // pred_check_branch
        %126 = sbr.rel (%p124) target = $region16
      $region15: #{basic_block.3} parent=11 // pred_region
        _
      $region16: #{basic_block.3} parent=11 // pred_fallthru
        _
    $region12: #{basic_block.3} parent=5 // pred_fallthru
      _
    %p127 = scmp.lt.s32.totalorder %s10, 2
    // Predicated region
    $region17: #{basic_block.3} parent=5 // pred_check
      %p128 = pneg %p127
    $region18: #{basic_block.3} parent=5 // pred_check_branch
      %130 = sbr.rel (%p128) target = $region20
    $region19: #{basic_block.3} parent=5 // pred_region
      // Predicated region
      $region21: #{basic_block.3} parent=19 // pred_check
        %p131 = pneg %p30
      $region22: #{basic_block.3} parent=19 // pred_check_branch
        %133 = sbr.rel (%p131) target = $region24
      $region23: #{basic_block.3} parent=19 // pred_region
        %p134 = scmp.lt.s32.totalorder %s10, 1
        %s135 = scalar_select %p134, %s10, 1
        %s136 = smul.addr %s135, 2
        %s137 = smul.addr %s136, 8
        %s138 = scalar_lea.vmem %s0, %s137
      $region24: #{basic_block.3} parent=19 // pred_fallthru
        _
    $region20: #{basic_block.3} parent=5 // pred_fallthru
      _
    %p139 = scmp.le.s32.totalorder 1, %s10
    %p140 = scmp.lt.s32.totalorder %s10, 3
    %p141 = pnand %p139, %p140
    %p142 = pneg %p141
    // Predicated region
    $region25: #{basic_block.3} parent=5 // pred_check
      _
    $region26: #{basic_block.3} parent=5 // pred_check_branch
      %144 = sbr.rel (%p141) target = $region28
    $region27: #{basic_block.3} parent=5 // pred_region
      %s145 = ssub.s32 %s10, 1
      %p146 = scmp.lt.s32.totalorder %s15, 1
      %s147 = scalar_select %p146, %s15, 1
      %s148 = smul.addr %s147, 2
      %s149 = smul.addr %s148, 8
      %s150 = scalar_lea.vmem %s0, %s149
      %p151 = pneg %p36
      %p152 = pneg %p33
      %p153 = pneg %p57
      %p154 = pneg %p54
      %p155 = pneg %p83
      %p156 = pneg %p80
      %p157 = scmp.lt.s32.totalorder %s15, 1
      %s158 = scalar_select %p157, %s15, 1
      %s159 = smul.addr %s158, 2
      %s160 = smul.addr %s159, 8
      %s161 = scalar_lea.vmem %s2, %s160
      %p162 = pneg %p109
      %p163 = pneg %p106
      %p164 = scmp.lt.s32.totalorder %s15, 1
      %s165 = scalar_select %p164, %s15, 1
      %s166 = smul.addr %s165, 8
      %s167 = scalar_lea.vmem %s3, %s166
      %p168 = scmp.lt.s32.totalorder %s15, 1
      %s169 = scalar_select %p168, %s15, 1
      %s170 = smul.addr %s169, 2
      %s171 = smul.addr %s170, 8
      %s172 = scalar_lea.vmem %s0, %s171
      %p173 = scmp.lt.s32.totalorder %s15, 1
      %s174 = scalar_select %p173, %s15, 1
      %s175 = smul.addr %s174, 2
      %s176 = smul.addr %s175, 8
      %s177 = scalar_lea.vmem %s2, %s176
      %p178 = scmp.lt.s32.totalorder %s15, 1
      %s179 = scalar_select %p178, %s15, 1
      %s180 = smul.addr %s179, 8
      %s181 = scalar_lea.vmem %s3, %s180
      %v182 = vld [vmem:[%s172] sm:$0xff]
      %v183 = vld [vmem:[%s172 + $0x8] sm:$0xff]
      %vm186 = vcmask 1040384
      %v187 = vrot.slane %v182, 7
      %v188 = vrot.slane %v183, 7
      %v189 = vsel %vm186, %v187, %v188
      %v192 = vsel %vm186, 0.0, %v187
      %vm193 = vcmask 1046528
      %v194 = vrot.slane %v182, 1
      %v195 = vrot.slane %v183, 1
      %v196 = vsel %vm193, %v194, %v195
      %v199 = vsel %vm193, %v195, 0.0
      %v200 = vld [vmem:[%s1] sm:$0xff]
      %v201 = vld [vmem:[%s1 + $0x8] sm:$0xff]
      %v202 = vld [vmem:[%s1 + $0x10] sm:$0xff]
      %v203 = vld [vmem:[%s1 + $0x18] sm:$0xff]
      %v204 = vld [vmem:[%s1 + $0x20] sm:$0xff]
      %v205 = vld [vmem:[%s1 + $0x28] sm:$0xff]
      %v206 = vld [vmem:[%s1 + $0x30] sm:$0xff]
      %v207 = vld [vmem:[%s1 + $0x38] sm:$0xff]
      %v208 = vld [vmem:[%s1 + $0x40] sm:$0xff]
      %v209 = vld [vmem:[%s1 + $0x48] sm:$0xff]
      %v210 = vld [vmem:[%s1 + $0x50] sm:$0xff]
      %v211 = vld [vmem:[%s1 + $0x58] sm:$0xff]
      %v212 = vld [vmem:[%s1 + $0x60] sm:$0xff]
      %v213 = vld [vmem:[%s1 + $0x68] sm:$0xff]
      %v214 = vld [vmem:[%s1 + $0x70] sm:$0xff]
      %v215 = vld [vmem:[%s1 + $0x78] sm:$0xff]
      %s216 = scalar_lea.vmem %s1, 128
      %v217 = vld [vmem:[%s216] sm:$0xff]
      %v218 = vld [vmem:[%s216 + $0x8] sm:$0xff]
      %v219 = vld [vmem:[%s216 + $0x10] sm:$0xff]
      %v220 = vld [vmem:[%s216 + $0x18] sm:$0xff]
      %v221 = vld [vmem:[%s216 + $0x20] sm:$0xff]
      %v222 = vld [vmem:[%s216 + $0x28] sm:$0xff]
      %v223 = vld [vmem:[%s216 + $0x30] sm:$0xff]
      %v224 = vld [vmem:[%s216 + $0x38] sm:$0xff]
      %v225 = vld [vmem:[%s216 + $0x40] sm:$0xff]
      %v226 = vld [vmem:[%s216 + $0x48] sm:$0xff]
      %v227 = vld [vmem:[%s216 + $0x50] sm:$0xff]
      %v228 = vld [vmem:[%s216 + $0x58] sm:$0xff]
      %v229 = vld [vmem:[%s216 + $0x60] sm:$0xff]
      %v230 = vld [vmem:[%s216 + $0x68] sm:$0xff]
      %v231 = vld [vmem:[%s216 + $0x70] sm:$0xff]
      %v232 = vld [vmem:[%s216 + $0x78] sm:$0xff]
      %233 = vmatpush.msra.mxu0 %v232
      %234 = vmatpush.msra.mxu0 %v231
      %235 = vmatpush.msra.mxu0 %v230
      %236 = vmatpush.msra.mxu0 %v229
      %237 = vmatpush.msra.mxu0 %v228
      %238 = vmatpush.msra.mxu0 %v227
      %239 = vmatpush.msra.mxu0 %v226
      %240 = vmatpush.msra.mxu0 %v225
      %241 = vmatpush.msra.mxu0 %v224
      %242 = vmatpush.msra.mxu0 %v223
      %243 = vmatpush.msra.mxu0 %v222
      %244 = vmatpush.msra.mxu0 %v221
      %245 = vmatpush.msra.mxu0 %v220
      %246 = vmatpush.msra.mxu0 %v219
      %247 = vmatpush.msra.mxu0 %v218
      %248 = vmatpush.msra.mxu0 %v217
      %249 = vmatmul.f32.gmra.mxu0 %v182
      %v250 = vpop.f32.mrf.mxu0
      %v251 = vadd.f32 0.0, %v250
      %252 = vmatmul.f32.gmra.mxu0 %v183
      %v253 = vpop.f32.mrf.mxu0
      %v254 = vadd.f32 0.0, %v253
      %255 = vdwg.mxu0
      %256 = vmatpush.msra.mxu0 %v215
      %257 = vmatpush.msra.mxu0 %v214
      %258 = vmatpush.msra.mxu0 %v213
      %259 = vmatpush.msra.mxu0 %v212
      %260 = vmatpush.msra.mxu0 %v211
      %261 = vmatpush.msra.mxu0 %v210
      %262 = vmatpush.msra.mxu0 %v209
      %263 = vmatpush.msra.mxu0 %v208
      %264 = vmatpush.msra.mxu0 %v207
      %265 = vmatpush.msra.mxu0 %v206
      %266 = vmatpush.msra.mxu0 %v205
      %267 = vmatpush.msra.mxu0 %v204
      %268 = vmatpush.msra.mxu0 %v203
      %269 = vmatpush.msra.mxu0 %v202
      %270 = vmatpush.msra.mxu0 %v201
      %271 = vmatpush.msra.mxu0 %v200
      %272 = vmatmul.f32.gmra.mxu0 %v192
      %v273 = vpop.f32.mrf.mxu0
      %v274 = vadd.f32 %v251, %v273
      %275 = vmatmul.f32.gmra.mxu0 %v189
      %v276 = vpop.f32.mrf.mxu0
      %v277 = vadd.f32 %v254, %v276
      %278 = vdwg.mxu0
      %s279 = scalar_lea.vmem %s1, 256
      %v280 = vld [vmem:[%s279] sm:$0xff]
      %v281 = vld [vmem:[%s279 + $0x8] sm:$0xff]
      %v282 = vld [vmem:[%s279 + $0x10] sm:$0xff]
      %v283 = vld [vmem:[%s279 + $0x18] sm:$0xff]
      %v284 = vld [vmem:[%s279 + $0x20] sm:$0xff]
      %v285 = vld [vmem:[%s279 + $0x28] sm:$0xff]
      %v286 = vld [vmem:[%s279 + $0x30] sm:$0xff]
      %v287 = vld [vmem:[%s279 + $0x38] sm:$0xff]
      %v288 = vld [vmem:[%s279 + $0x40] sm:$0xff]
      %v289 = vld [vmem:[%s279 + $0x48] sm:$0xff]
      %v290 = vld [vmem:[%s279 + $0x50] sm:$0xff]
      %v291 = vld [vmem:[%s279 + $0x58] sm:$0xff]
      %v292 = vld [vmem:[%s279 + $0x60] sm:$0xff]
      %v293 = vld [vmem:[%s279 + $0x68] sm:$0xff]
      %v294 = vld [vmem:[%s279 + $0x70] sm:$0xff]
      %v295 = vld [vmem:[%s279 + $0x78] sm:$0xff]
      %296 = vmatpush.msra.mxu0 %v295
      %297 = vmatpush.msra.mxu0 %v294
      %298 = vmatpush.msra.mxu0 %v293
      %299 = vmatpush.msra.mxu0 %v292
      %300 = vmatpush.msra.mxu0 %v291
      %301 = vmatpush.msra.mxu0 %v290
      %302 = vmatpush.msra.mxu0 %v289
      %303 = vmatpush.msra.mxu0 %v288
      %304 = vmatpush.msra.mxu0 %v287
      %305 = vmatpush.msra.mxu0 %v286
      %306 = vmatpush.msra.mxu0 %v285
      %307 = vmatpush.msra.mxu0 %v284
      %308 = vmatpush.msra.mxu0 %v283
      %309 = vmatpush.msra.mxu0 %v282
      %310 = vmatpush.msra.mxu0 %v281
      %311 = vmatpush.msra.mxu0 %v280
      %312 = vmatmul.f32.gmra.mxu0 %v196
      %v313 = vpop.f32.mrf.mxu0
      %v314 = vadd.f32 0.0, %v313
      %315 = vmatmul.f32.gmra.mxu0 %v199
      %v316 = vpop.f32.mrf.mxu0
      %v317 = vadd.f32 0.0, %v316
      %318 = vdwg.mxu0
      %v319 = vadd.f32 %v274, %v314
      %v320 = vadd.f32 %v277, %v317
      %321 = vst [vmem:[%s177] sm:$0xff] %v319
      %322 = vst [vmem:[%s177 + $0x8] sm:$0xff] %v320
      %v323 = vadd.f32 %v319, %v320
      %v324 = vrot.slane %v323, 4
      %v325 = vadd.f32 %v323, %v324
      %v326 = vrot.slane %v325, 2
      %v327 = vadd.f32 %v325, %v326
      %v328 = vrot.slane %v327, 1
      %v329 = vadd.f32 %v327, %v328
      %v330 = vmul.f32 %v329, 0.0625
      %v331 = vsub.f32 %v319, %v330
      %v332 = vsub.f32 %v320, %v330
      %v333 = vmul.f32 %v331, %v331
      %v334 = vmul.f32 %v332, %v332
      %v335 = vadd.f32 %v333, %v334
      %v336 = vrot.slane %v335, 4
      %v337 = vadd.f32 %v335, %v336
      %v338 = vrot.slane %v337, 2
      %v339 = vadd.f32 %v337, %v338
      %v340 = vrot.slane %v339, 1
      %v341 = vadd.f32 %v339, %v340
      %v342 = vsel %vm186, %v329, %v341
      %vm343 = vcmask 1041408
      %v344 = vsel %vm343, %v342, 0.0
      %345 = vst [vmem:[%s181] sm:$0xff] %v344
      %p346 = scmp.lt.s32.totalorder %s15, 1
      %s347 = scalar_select %p346, %s15, 1
      %s348 = smul.addr %s347, 2
      %s349 = smul.addr %s348, 8
      %s350 = scalar_lea.vmem %s2, %s349
      %p351 = scmp.lt.s32.totalorder %s15, 1
      %s352 = scalar_select %p351, %s15, 1
      %s353 = smul.addr %s352, 8
      %s354 = scalar_lea.vmem %s3, %s353
      // Predicated region
      $region29: #{basic_block.3} parent=27 // pred_check
        %p355 = pneg %p80
      $region30: #{basic_block.3} parent=27 // pred_check_branch
        %357 = sbr.rel (%p355) target = $region32
      $region31: #{basic_block.3} parent=27 // pred_region
        _
      $region32: #{basic_block.3} parent=27 // pred_fallthru
        _
      // Predicated region
      $region33: #{basic_block.3} parent=27 // pred_check
        %p358 = pneg %p106
      $region34: #{basic_block.3} parent=27 // pred_check_branch
        %360 = sbr.rel (%p358) target = $region36
      $region35: #{basic_block.3} parent=27 // pred_region
        _
      $region36: #{basic_block.3} parent=27 // pred_fallthru
        _
    $region28: #{basic_block.3} parent=5 // pred_fallthru
      _
    %p361 = scmp.le.s32.totalorder 2, %s10
    // Predicated region
    $region37: #{basic_block.3} parent=5 // pred_check
      %p362 = pneg %p361
    $region38: #{basic_block.3} parent=5 // pred_check_branch
      %364 = sbr.rel (%p362) target = $region40
    $region39: #{basic_block.3} parent=5 // pred_region
      %s365 = ssub.s32 %s10, 2
      // Predicated region
      $region41: #{basic_block.3} parent=39 // pred_check
        %p366 = pneg %p86
      $region42: #{basic_block.3} parent=39 // pred_check_branch
        %368 = sbr.rel (%p366) target = $region44
      $region43: #{basic_block.3} parent=39 // pred_region
        %p369 = scmp.lt.s32.totalorder %s16, 1
        %s370 = scalar_select %p369, %s16, 1
        %s371 = smul.addr %s370, 2
        %s372 = smul.addr %s371, 8
        %s373 = scalar_lea.vmem %s2, %s372
      $region44: #{basic_block.3} parent=39 // pred_fallthru
        _
      // Predicated region
      $region45: #{basic_block.3} parent=39 // pred_check
        %p374 = pneg %p112
      $region46: #{basic_block.3} parent=39 // pred_check_branch
        %376 = sbr.rel (%p374) target = $region48
      $region47: #{basic_block.3} parent=39 // pred_region
        %p377 = scmp.lt.s32.totalorder %s16, 1
        %s378 = scalar_select %p377, %s16, 1
        %s379 = smul.addr %s378, 8
        %s380 = scalar_lea.vmem %s3, %s379
      $region48: #{basic_block.3} parent=39 // pred_fallthru
        _
    $region40: #{basic_block.3} parent=5 // pred_fallthru
      _
  $region6: #{basic_block.3} parent=0 // loop_footer
    %s14 = sadd.s32 1, %s10
  $region7: #{basic_block.3} parent=0 // loop_footer_branch
    %9 = sbr.rel target = $region3
  $region8: #{basic_block.3} parent=0 // loop_exit
    _

// kernel: basic_block.4
$region0: #{basic_block.4}
  #allocation0 [shape = 'u32[]', space=smem, size = 0x4, offset = 0x4, fixed_abs, tag = 'smem constant byte address 0x4 - core index']
  #allocation1 [shape = 'u32[72,128]{1,0:T(1,128)}', space=vmem, size = 0x9000, scoped, tag = 'internal scratch']
  %s0 = inlined_call_operand.vmem [shape: f32[2,16,128], index: 0, kind: input, shape index: {}]
  %s1 = inlined_call_operand.vmem [shape: f32[1,128], index: 1, kind: input, shape index: {}]
  %s2 = inlined_call_operand.vmem [shape: f32[1,128], index: 2, kind: input, shape index: {}]
  %s3 = inlined_call_operand.vmem [shape: f32[3,128,128], index: 3, kind: input, shape index: {}]
  %s4 = inlined_call_operand.vmem [shape: f32[2,16,128], index: 4, kind: output, shape index: {0}]
  %s5 = inlined_call_operand.vmem [shape: f32[2,8,128], index: 5, kind: output, shape index: {1}]
  %6 = xla_tuple %s4, %s5
  %s7 = sld [smem:[#allocation0]]
  $region57: #{basic_block.4} parent=0
    _
  %s9 = ssub.s32 1, %s7
  %s10 = scalar_select 0, %s9, %s7
  loop: start=0, step=1, limit=4
  $region2: #{basic_block.4} parent=0 // loop_pre_header
    _
  $region3: #{basic_block.4} parent=0 // loop_header
    %s12 = sphi 0, %s16
    %p13 = scmp.ge.s32.totalorder %s12, 4
    %s22 = sphi 0, %s24
    %s25 = sphi 0, %s22
    %s26 = sphi 0, %s25
    %s42 = sphi 0, %s26
    %s46 = sphi 0, %s46
    %s48 = sphi 0, %s46
    %s49 = sphi 0, %s48
    %s63 = sphi 0, %s49
    %s67 = sphi 0, %s67
    %s69 = sphi 0, %s67
    %s70 = sphi 0, %s69
    %s84 = sphi 0, %s70
    %s88 = sphi 0, %s88
    %s90 = sphi 0, %s88
    %s91 = sphi 0, %s90
    %s105 = sphi 0, %s91
    %s111 = sphi 0, %s113
    %s114 = sphi 0, %s111
    %s115 = sphi 0, %s114
    %s131 = sphi 0, %s115
    %s137 = sphi 0, %s139
    %s140 = sphi 0, %s137
    %s141 = sphi 0, %s140
    %s157 = sphi 0, %s141
  $region4: #{basic_block.4} parent=0 // loop_header_branch
    %15 = sbr.rel (%p13) target = $region8
  $region5: #{basic_block.4} parent=0 // loop_body
    %s17 = ssub.s32 %s12, 1
    %s18 = ssub.s32 %s12, 2
    %s19 = sadd.s32 %s12, 1
    %s20 = ssub.s32 %s12, %s19
    %p21 = scmp.eq.s32.totalorder %s20, 0
    %s23 = sadd.s32 %s22, 1
    %s24 = scalar_select %p21, %s22, %s23
    %p27 = pneg %p21
    %p28 = scmp.eq.s32.totalorder %s12, 1
    %p29 = por %p27, %p28
    %p30 = scmp.ne.s32.totalorder %s22, %s25
    %p31 = scmp.eq.s32.totalorder %s12, 0
    %p32 = por %p30, %p31
    %p33 = scmp.ne.s32.totalorder %s22, %s25
    %p34 = scmp.eq.s32.totalorder %s17, 1
    %p35 = por %p33, %p34
    %p36 = scmp.ne.s32.totalorder %s25, %s26
    %p37 = scmp.eq.s32.totalorder %s17, 0
    %p38 = por %p36, %p37
    %p39 = scmp.ne.s32.totalorder %s25, %s26
    %p40 = scmp.eq.s32.totalorder %s18, 1
    %p41 = por %p39, %p40
    %p43 = scmp.ne.s32.totalorder %s26, %s42
    %p44 = scmp.eq.s32.totalorder %s18, 0
    %p45 = por %p43, %p44
    %s47 = sadd.s32 %s46, 1
    %p50 = scmp.eq.s32.totalorder %s12, 1
    %p51 = scmp.ne.s32.totalorder %s46, %s48
    %p52 = scmp.eq.s32.totalorder %s12, 0
    %p53 = por %p51, %p52
    %p54 = scmp.ne.s32.totalorder %s46, %s48
    %p55 = scmp.eq.s32.totalorder %s17, 1
    %p56 = por %p54, %p55
    %p57 = scmp.ne.s32.totalorder %s48, %s49
    %p58 = scmp.eq.s32.totalorder %s17, 0
    %p59 = por %p57, %p58
    %p60 = scmp.ne.s32.totalorder %s48, %s49
    %p61 = scmp.eq.s32.totalorder %s18, 1
    %p62 = por %p60, %p61
    %p64 = scmp.ne.s32.totalorder %s49, %s63
    %p65 = scmp.eq.s32.totalorder %s18, 0
    %p66 = por %p64, %p65
    %s68 = sadd.s32 %s67, 1
    %p71 = scmp.eq.s32.totalorder %s12, 1
    %p72 = scmp.ne.s32.totalorder %s67, %s69
    %p73 = scmp.eq.s32.totalorder %s12, 0
    %p74 = por %p72, %p73
    %p75 = scmp.ne.s32.totalorder %s67, %s69
    %p76 = scmp.eq.s32.totalorder %s17, 1
    %p77 = por %p75, %p76
    %p78 = scmp.ne.s32.totalorder %s69, %s70
    %p79 = scmp.eq.s32.totalorder %s17, 0
    %p80 = por %p78, %p79
    %p81 = scmp.ne.s32.totalorder %s69, %s70
    %p82 = scmp.eq.s32.totalorder %s18, 1
    %p83 = por %p81, %p82
    %p85 = scmp.ne.s32.totalorder %s70, %s84
    %p86 = scmp.eq.s32.totalorder %s18, 0
    %p87 = por %p85, %p86
    %s89 = sadd.s32 %s88, 1
    %p92 = scmp.eq.s32.totalorder %s12, 1
    %p93 = scmp.ne.s32.totalorder %s88, %s90
    %p94 = scmp.eq.s32.totalorder %s12, 0
    %p95 = por %p93, %p94
    %p96 = scmp.ne.s32.totalorder %s88, %s90
    %p97 = scmp.eq.s32.totalorder %s17, 1
    %p98 = por %p96, %p97
    %p99 = scmp.ne.s32.totalorder %s90, %s91
    %p100 = scmp.eq.s32.totalorder %s17, 0
    %p101 = por %p99, %p100
    %p102 = scmp.ne.s32.totalorder %s90, %s91
    %p103 = scmp.eq.s32.totalorder %s18, 1
    %p104 = por %p102, %p103
    %p106 = scmp.ne.s32.totalorder %s91, %s105
    %p107 = scmp.eq.s32.totalorder %s18, 0
    %p108 = por %p106, %p107
    %s109 = ssub.s32 %s12, %s19
    %p110 = scmp.eq.s32.totalorder %s109, 0
    %s112 = sadd.s32 %s111, 1
    %s113 = scalar_select %p110, %s111, %s112
    %p116 = pneg %p110
    %p117 = scmp.eq.s32.totalorder %s12, 1
    %p118 = por %p116, %p117
    %p119 = scmp.ne.s32.totalorder %s111, %s114
    %p120 = scmp.eq.s32.totalorder %s12, 0
    %p121 = por %p119, %p120
    %p122 = scmp.ne.s32.totalorder %s111, %s114
    %p123 = scmp.eq.s32.totalorder %s17, 1
    %p124 = por %p122, %p123
    %p125 = scmp.ne.s32.totalorder %s114, %s115
    %p126 = scmp.eq.s32.totalorder %s17, 0
    %p127 = por %p125, %p126
    %p128 = scmp.ne.s32.totalorder %s114, %s115
    %p129 = scmp.eq.s32.totalorder %s18, 1
    %p130 = por %p128, %p129
    %p132 = scmp.ne.s32.totalorder %s115, %s131
    %p133 = scmp.eq.s32.totalorder %s18, 0
    %p134 = por %p132, %p133
    %s135 = ssub.s32 %s12, %s19
    %p136 = scmp.eq.s32.totalorder %s135, 0
    %s138 = sadd.s32 %s137, 1
    %s139 = scalar_select %p136, %s137, %s138
    %p142 = pneg %p136
    %p143 = scmp.eq.s32.totalorder %s12, 1
    %p144 = por %p142, %p143
    %p145 = scmp.ne.s32.totalorder %s137, %s140
    %p146 = scmp.eq.s32.totalorder %s12, 0
    %p147 = por %p145, %p146
    %p148 = scmp.ne.s32.totalorder %s137, %s140
    %p149 = scmp.eq.s32.totalorder %s17, 1
    %p150 = por %p148, %p149
    %p151 = scmp.ne.s32.totalorder %s140, %s141
    %p152 = scmp.eq.s32.totalorder %s17, 0
    %p153 = por %p151, %p152
    %p154 = scmp.ne.s32.totalorder %s140, %s141
    %p155 = scmp.eq.s32.totalorder %s18, 1
    %p156 = por %p154, %p155
    %p158 = scmp.ne.s32.totalorder %s141, %s157
    %p159 = scmp.eq.s32.totalorder %s18, 0
    %p160 = por %p158, %p159
    %p161 = scmp.le.s32.totalorder 1, %s12
    %p162 = scmp.lt.s32.totalorder %s12, 3
    %p163 = pnand %p161, %p162
    %p164 = pneg %p163
    // Predicated region
    $region9: #{basic_block.4} parent=5 // pred_check
      _
    $region10: #{basic_block.4} parent=5 // pred_check_branch
      %166 = sbr.rel (%p163) target = $region12
    $region11: #{basic_block.4} parent=5 // pred_region
      %s167 = ssub.s32 %s12, 1
      // Predicated region
      $region13: #{basic_block.4} parent=11 // pred_check
        %p168 = pneg %p59
      $region14: #{basic_block.4} parent=11 // pred_check_branch
        %170 = sbr.rel (%p168) target = $region16
      $region15: #{basic_block.4} parent=11 // pred_region
        _
      $region16: #{basic_block.4} parent=11 // pred_fallthru
        _
      // Predicated region
      $region17: #{basic_block.4} parent=11 // pred_check
        %p171 = pneg %p80
      $region18: #{basic_block.4} parent=11 // pred_check_branch
        %173 = sbr.rel (%p171) target = $region20
      $region19: #{basic_block.4} parent=11 // pred_region
        _
      $region20: #{basic_block.4} parent=11 // pred_fallthru
        _
      // Predicated region
      $region21: #{basic_block.4} parent=11 // pred_check
        %p174 = pneg %p101
      $region22: #{basic_block.4} parent=11 // pred_check_branch
        %176 = sbr.rel (%p174) target = $region24
      $region23: #{basic_block.4} parent=11 // pred_region
        _
      $region24: #{basic_block.4} parent=11 // pred_fallthru
        _
    $region12: #{basic_block.4} parent=5 // pred_fallthru
      _
    %p177 = scmp.lt.s32.totalorder %s12, 2
    // Predicated region
    $region25: #{basic_block.4} parent=5 // pred_check
      %p178 = pneg %p177
    $region26: #{basic_block.4} parent=5 // pred_check_branch
      %180 = sbr.rel (%p178) target = $region28
    $region27: #{basic_block.4} parent=5 // pred_region
      // Predicated region
      $region29: #{basic_block.4} parent=27 // pred_check
        %p181 = pneg %p32
      $region30: #{basic_block.4} parent=27 // pred_check_branch
        %183 = sbr.rel (%p181) target = $region32
      $region31: #{basic_block.4} parent=27 // pred_region
        %p184 = scmp.lt.s32.totalorder %s12, 1
        %s185 = scalar_select %p184, %s12, 1
        %s186 = smul.addr %s185, 2
        %s187 = smul.addr %s186, 8
        %s188 = scalar_lea.vmem %s0, %s187
      $region32: #{basic_block.4} parent=27 // pred_fallthru
        _
    $region28: #{basic_block.4} parent=5 // pred_fallthru
      _
    %p189 = scmp.le.s32.totalorder 1, %s12
    %p190 = scmp.lt.s32.totalorder %s12, 3
    %p191 = pnand %p189, %p190
    %p192 = pneg %p191
    // Predicated region
    $region33: #{basic_block.4} parent=5 // pred_check
      _
    $region34: #{basic_block.4} parent=5 // pred_check_branch
      %194 = sbr.rel (%p191) target = $region36
    $region35: #{basic_block.4} parent=5 // pred_region
      %s195 = ssub.s32 %s12, 1
      %p196 = scmp.lt.s32.totalorder %s17, 1
      %s197 = scalar_select %p196, %s17, 1
      %s198 = smul.addr %s197, 2
      %s199 = smul.addr %s198, 8
      %s200 = scalar_lea.vmem %s0, %s199
      %p201 = pneg %p38
      %p202 = pneg %p35
      %p203 = pneg %p59
      %p204 = pneg %p56
      %p205 = pneg %p80
      %p206 = pneg %p77
      %p207 = pneg %p101
      %p208 = pneg %p98
      %p209 = pneg %p127
      %p210 = pneg %p124
      %p211 = scmp.lt.s32.totalorder %s17, 1
      %s212 = scalar_select %p211, %s17, 1
      %s213 = smul.addr %s212, 2
      %s214 = smul.addr %s213, 8
      %s215 = scalar_lea.vmem %s4, %s214
      %p216 = pneg %p153
      %p217 = pneg %p150
      %p218 = scmp.lt.s32.totalorder %s17, 1
      %s219 = scalar_select %p218, %s17, 1
      %s220 = smul.addr %s219, 8
      %s221 = scalar_lea.vmem %s5, %s220
      %p222 = scmp.lt.s32.totalorder %s17, 1
      %s223 = scalar_select %p222, %s17, 1
      %s224 = smul.addr %s223, 2
      %s225 = smul.addr %s224, 8
      %s226 = scalar_lea.vmem %s0, %s225
      %p227 = scmp.lt.s32.totalorder %s17, 1
      %s228 = scalar_select %p227, %s17, 1
      %s229 = smul.addr %s228, 2
      %s230 = smul.addr %s229, 8
      %s231 = scalar_lea.vmem %s4, %s230
      %p232 = scmp.lt.s32.totalorder %s17, 1
      %s233 = scalar_select %p232, %s17, 1
      %s234 = smul.addr %s233, 8
      %s235 = scalar_lea.vmem %s5, %s234
      %v236 = vld [vmem:[%s1] sm:$0x1]
      %v237 = vld [vmem:[%s2] sm:$0x1]
      %v238 = vld [vmem:[%s226] sm:$0xff]
      %v239 = vld [vmem:[%s226 + $0x8] sm:$0xff]
      %v241 = vperm.slane %v236, 0
      %v243 = vmul.f32 %v238, %v241
      %v244 = vmul.f32 %v239, %v241
      %v246 = vperm.slane %v237, 0
      %v248 = vadd.f32 %v243, %v246
      %v249 = vadd.f32 %v244, %v246
      %v250 = vmax.f32 %v248, 0.0
      %v251 = vmax.f32 %v249, 0.0
      %vm254 = vcmask 1040384
      %v255 = vrot.slane %v250, 7
      %v256 = vrot.slane %v251, 7
      %v257 = vsel %vm254, %v255, %v256
      %v260 = vsel %vm254, 0.0, %v255
      %vm261 = vcmask 1046528
      %v262 = vrot.slane %v250, 1
      %v263 = vrot.slane %v251, 1
      %v264 = vsel %vm261, %v262, %v263
      %v267 = vsel %vm261, %v263, 0.0
      %v268 = vld [vmem:[%s3] sm:$0xff]
      %v269 = vld [vmem:[%s3 + $0x8] sm:$0xff]
      %v270 = vld [vmem:[%s3 + $0x10] sm:$0xff]
      %v271 = vld [vmem:[%s3 + $0x18] sm:$0xff]
      %v272 = vld [vmem:[%s3 + $0x20] sm:$0xff]
      %v273 = vld [vmem:[%s3 + $0x28] sm:$0xff]
      %v274 = vld [vmem:[%s3 + $0x30] sm:$0xff]
      %v275 = vld [vmem:[%s3 + $0x38] sm:$0xff]
      %v276 = vld [vmem:[%s3 + $0x40] sm:$0xff]
      %v277 = vld [vmem:[%s3 + $0x48] sm:$0xff]
      %v278 = vld [vmem:[%s3 + $0x50] sm:$0xff]
      %v279 = vld [vmem:[%s3 + $0x58] sm:$0xff]
      %v280 = vld [vmem:[%s3 + $0x60] sm:$0xff]
      %v281 = vld [vmem:[%s3 + $0x68] sm:$0xff]
      %v282 = vld [vmem:[%s3 + $0x70] sm:$0xff]
      %v283 = vld [vmem:[%s3 + $0x78] sm:$0xff]
      %s284 = scalar_lea.vmem %s3, 128
      %v285 = vld [vmem:[%s284] sm:$0xff]
      %v286 = vld [vmem:[%s284 + $0x8] sm:$0xff]
      %v287 = vld [vmem:[%s284 + $0x10] sm:$0xff]
      %v288 = vld [vmem:[%s284 + $0x18] sm:$0xff]
      %v289 = vld [vmem:[%s284 + $0x20] sm:$0xff]
      %v290 = vld [vmem:[%s284 + $0x28] sm:$0xff]
      %v291 = vld [vmem:[%s284 + $0x30] sm:$0xff]
      %v292 = vld [vmem:[%s284 + $0x38] sm:$0xff]
      %v293 = vld [vmem:[%s284 + $0x40] sm:$0xff]
      %v294 = vld [vmem:[%s284 + $0x48] sm:$0xff]
      %v295 = vld [vmem:[%s284 + $0x50] sm:$0xff]
      %v296 = vld [vmem:[%s284 + $0x58] sm:$0xff]
      %v297 = vld [vmem:[%s284 + $0x60] sm:$0xff]
      %v298 = vld [vmem:[%s284 + $0x68] sm:$0xff]
      %v299 = vld [vmem:[%s284 + $0x70] sm:$0xff]
      %v300 = vld [vmem:[%s284 + $0x78] sm:$0xff]
      %301 = vmatpush.msra.mxu0 %v300
      %302 = vmatpush.msra.mxu0 %v299
      %303 = vmatpush.msra.mxu0 %v298
      %304 = vmatpush.msra.mxu0 %v297
      %305 = vmatpush.msra.mxu0 %v296
      %306 = vmatpush.msra.mxu0 %v295
      %307 = vmatpush.msra.mxu0 %v294
      %308 = vmatpush.msra.mxu0 %v293
      %309 = vmatpush.msra.mxu0 %v292
      %310 = vmatpush.msra.mxu0 %v291
      %311 = vmatpush.msra.mxu0 %v290
      %312 = vmatpush.msra.mxu0 %v289
      %313 = vmatpush.msra.mxu0 %v288
      %314 = vmatpush.msra.mxu0 %v287
      %315 = vmatpush.msra.mxu0 %v286
      %316 = vmatpush.msra.mxu0 %v285
      %317 = vmatmul.f32.gmra.mxu0 %v250
      %v318 = vpop.f32.mrf.mxu0
      %v319 = vadd.f32 0.0, %v318
      %320 = vmatmul.f32.gmra.mxu0 %v251
      %v321 = vpop.f32.mrf.mxu0
      %v322 = vadd.f32 0.0, %v321
      %323 = vdwg.mxu0
      %324 = vmatpush.msra.mxu0 %v283
      %325 = vmatpush.msra.mxu0 %v282
      %326 = vmatpush.msra.mxu0 %v281
      %327 = vmatpush.msra.mxu0 %v280
      %328 = vmatpush.msra.mxu0 %v279
      %329 = vmatpush.msra.mxu0 %v278
      %330 = vmatpush.msra.mxu0 %v277
      %331 = vmatpush.msra.mxu0 %v276
      %332 = vmatpush.msra.mxu0 %v275
      %333 = vmatpush.msra.mxu0 %v274
      %334 = vmatpush.msra.mxu0 %v273
      %335 = vmatpush.msra.mxu0 %v272
      %336 = vmatpush.msra.mxu0 %v271
      %337 = vmatpush.msra.mxu0 %v270
      %338 = vmatpush.msra.mxu0 %v269
      %339 = vmatpush.msra.mxu0 %v268
      %340 = vmatmul.f32.gmra.mxu0 %v260
      %v341 = vpop.f32.mrf.mxu0
      %v342 = vadd.f32 %v319, %v341
      %343 = vmatmul.f32.gmra.mxu0 %v257
      %v344 = vpop.f32.mrf.mxu0
      %v345 = vadd.f32 %v322, %v344
      %346 = vdwg.mxu0
      %s347 = scalar_lea.vmem %s3, 256
      %v348 = vld [vmem:[%s347] sm:$0xff]
      %v349 = vld [vmem:[%s347 + $0x8] sm:$0xff]
      %v350 = vld [vmem:[%s347 + $0x10] sm:$0xff]
      %v351 = vld [vmem:[%s347 + $0x18] sm:$0xff]
      %v352 = vld [vmem:[%s347 + $0x20] sm:$0xff]
      %v353 = vld [vmem:[%s347 + $0x28] sm:$0xff]
      %v354 = vld [vmem:[%s347 + $0x30] sm:$0xff]
      %v355 = vld [vmem:[%s347 + $0x38] sm:$0xff]
      %v356 = vld [vmem:[%s347 + $0x40] sm:$0xff]
      %v357 = vld [vmem:[%s347 + $0x48] sm:$0xff]
      %v358 = vld [vmem:[%s347 + $0x50] sm:$0xff]
      %v359 = vld [vmem:[%s347 + $0x58] sm:$0xff]
      %v360 = vld [vmem:[%s347 + $0x60] sm:$0xff]
      %v361 = vld [vmem:[%s347 + $0x68] sm:$0xff]
      %v362 = vld [vmem:[%s347 + $0x70] sm:$0xff]
      %v363 = vld [vmem:[%s347 + $0x78] sm:$0xff]
      %364 = vmatpush.msra.mxu0 %v363
      %365 = vmatpush.msra.mxu0 %v362
      %366 = vmatpush.msra.mxu0 %v361
      %367 = vmatpush.msra.mxu0 %v360
      %368 = vmatpush.msra.mxu0 %v359
      %369 = vmatpush.msra.mxu0 %v358
      %370 = vmatpush.msra.mxu0 %v357
      %371 = vmatpush.msra.mxu0 %v356
      %372 = vmatpush.msra.mxu0 %v355
      %373 = vmatpush.msra.mxu0 %v354
      %374 = vmatpush.msra.mxu0 %v353
      %375 = vmatpush.msra.mxu0 %v352
      %376 = vmatpush.msra.mxu0 %v351
      %377 = vmatpush.msra.mxu0 %v350
      %378 = vmatpush.msra.mxu0 %v349
      %379 = vmatpush.msra.mxu0 %v348
      %380 = vmatmul.f32.gmra.mxu0 %v264
      %v381 = vpop.f32.mrf.mxu0
      %v382 = vadd.f32 0.0, %v381
      %383 = vmatmul.f32.gmra.mxu0 %v267
      %v384 = vpop.f32.mrf.mxu0
      %v385 = vadd.f32 0.0, %v384
      %386 = vdwg.mxu0
      %v387 = vadd.f32 %v342, %v382
      %v388 = vadd.f32 %v345, %v385
      %389 = vst [vmem:[%s231] sm:$0xff] %v387
      %390 = vst [vmem:[%s231 + $0x8] sm:$0xff] %v388
      %v391 = vadd.f32 %v387, %v388
      %v392 = vrot.slane %v391, 4
      %v393 = vadd.f32 %v391, %v392
      %v394 = vrot.slane %v393, 2
      %v395 = vadd.f32 %v393, %v394
      %v396 = vrot.slane %v395, 1
      %v397 = vadd.f32 %v395, %v396
      %v398 = vmul.f32 %v397, 0.0625
      %v399 = vsub.f32 %v387, %v398
      %v400 = vsub.f32 %v388, %v398
      %v401 = vmul.f32 %v399, %v399
      %v402 = vmul.f32 %v400, %v400
      %v403 = vadd.f32 %v401, %v402
      %v404 = vrot.slane %v403, 4
      %v405 = vadd.f32 %v403, %v404
      %v406 = vrot.slane %v405, 2
      %v407 = vadd.f32 %v405, %v406
      %v408 = vrot.slane %v407, 1
      %v409 = vadd.f32 %v407, %v408
      %v410 = vsel %vm254, %v397, %v409
      %vm411 = vcmask 1041408
      %v412 = vsel %vm411, %v410, 0.0
      %413 = vst [vmem:[%s235] sm:$0xff] %v412
      %p414 = scmp.lt.s32.totalorder %s17, 1
      %s415 = scalar_select %p414, %s17, 1
      %s416 = smul.addr %s415, 2
      %s417 = smul.addr %s416, 8
      %s418 = scalar_lea.vmem %s4, %s417
      %p419 = scmp.lt.s32.totalorder %s17, 1
      %s420 = scalar_select %p419, %s17, 1
      %s421 = smul.addr %s420, 8
      %s422 = scalar_lea.vmem %s5, %s421
      // Predicated region
      $region37: #{basic_block.4} parent=35 // pred_check
        %p423 = pneg %p124
      $region38: #{basic_block.4} parent=35 // pred_check_branch
        %425 = sbr.rel (%p423) target = $region40
      $region39: #{basic_block.4} parent=35 // pred_region
        _
      $region40: #{basic_block.4} parent=35 // pred_fallthru
        _
      // Predicated region
      $region41: #{basic_block.4} parent=35 // pred_check
        %p426 = pneg %p150
      $region42: #{basic_block.4} parent=35 // pred_check_branch
        %428 = sbr.rel (%p426) target = $region44
      $region43: #{basic_block.4} parent=35 // pred_region
        _
      $region44: #{basic_block.4} parent=35 // pred_fallthru
        _
    $region36: #{basic_block.4} parent=5 // pred_fallthru
      _
    %p429 = scmp.le.s32.totalorder 2, %s12
    // Predicated region
    $region45: #{basic_block.4} parent=5 // pred_check
      %p430 = pneg %p429
    $region46: #{basic_block.4} parent=5 // pred_check_branch
      %432 = sbr.rel (%p430) target = $region48
    $region47: #{basic_block.4} parent=5 // pred_region
      %s433 = ssub.s32 %s12, 2
      // Predicated region
      $region49: #{basic_block.4} parent=47 // pred_check
        %p434 = pneg %p130
      $region50: #{basic_block.4} parent=47 // pred_check_branch
        %436 = sbr.rel (%p434) target = $region52
      $region51: #{basic_block.4} parent=47 // pred_region
        %p437 = scmp.lt.s32.totalorder %s18, 1
        %s438 = scalar_select %p437, %s18, 1
        %s439 = smul.addr %s438, 2
        %s440 = smul.addr %s439, 8
        %s441 = scalar_lea.vmem %s4, %s440
      $region52: #{basic_block.4} parent=47 // pred_fallthru
        _
      // Predicated region
      $region53: #{basic_block.4} parent=47 // pred_check
        %p442 = pneg %p156
      $region54: #{basic_block.4} parent=47 // pred_check_branch
        %444 = sbr.rel (%p442) target = $region56
      $region55: #{basic_block.4} parent=47 // pred_region
        %p445 = scmp.lt.s32.totalorder %s18, 1
        %s446 = scalar_select %p445, %s18, 1
        %s447 = smul.addr %s446, 8
        %s448 = scalar_lea.vmem %s5, %s447
      $region56: #{basic_block.4} parent=47 // pred_fallthru
        _
    $region48: #{basic_block.4} parent=5 // pred_fallthru
      _
  $region6: #{basic_block.4} parent=0 // loop_footer
    %s16 = sadd.s32 1, %s12
  $region7: #{basic_block.4} parent=0 // loop_footer_branch
    %11 = sbr.rel target = $region3
  $region8: #{basic_block.4} parent=0 // loop_exit
    _

</llo_original>
